<compile_context>
chip_gen: v7x
topology: tpu7x:2x2x1
jax: 0.10.0
libtpu: 0.0.40
codegen_flags: <defaults>
</compile_context>

<pallas_src>
import numpy as np
import jax
import jax.numpy as jnp
from jax import lax
from jax.experimental import pallas as pl
from jax.experimental.pallas import tpu as pltpu

VID_DIM = 1280      # x[:, :, :1280] -> video features (unused by the forward)
SENS_DIM = 36       # nn.GRU(input_size=36) -> x[:, :, 1280:]
HIDDEN = 8          # nn.GRU(hidden_size=8)
D1_OUT = 10         # nn.Linear(8*clip_len, 10)
D2_OUT = 6          # nn.Linear(10, 6)
MAX_B_TILE = 256    # lane-aligned batch tile; v7x-safe (tile << 64 MiB VMEM)


def sensor_model_kernel(x_ref, wih_ref, bih_ref, whh_ref, bhh_ref,
                        w1_ref, b1_ref, w2_ref, b2_ref, out_ref):
    """Batch-on-lanes GRU + dense1 + dense2 for one batch tile.

    x_ref  : (T, 36, Bt) f32   sensor features, batch on the lane axis
    wih_ref: (24, 36)          PyTorch weight_ih_l0 (gate order r, z, n)
    bih_ref: (24, 1)
    whh_ref: (24, 8)           weight_hh_l0
    bhh_ref: (24, 1)
    w1_ref : (10, 8*T)         dense1.weight
    b1_ref : (10, 1)
    w2_ref : (6, 10)           dense2.weight
    b2_ref : (6, 1)
    out_ref: (6, Bt)           output^T (transposed back on the host)
    """
    T, _, Bt = x_ref.shape
    H = HIDDEN

    # ---- Hoisted input projection: all T timesteps in ONE batched MXU call,
    #      off the serial h-dependency chain.  (T,24,36)@(T,36,Bt) -> (T,24,Bt)
    wih_b = jnp.broadcast_to(wih_ref[...], (T,) + wih_ref.shape)
    gi_all = lax.dot_general(
        wih_b, x_ref[...],
        dimension_numbers=(((2,), (1,)), ((0,), (0,))),
        preferred_element_type=jnp.float32)
    gi_all = gi_all + bih_ref[...]            # (24,1) broadcasts over (T,24,Bt)

    whh = whh_ref[...]
    bhh = bhh_ref[...]

    # ---- Serial GRU recurrence (clip_len is a small static constant -> unroll).
    #      Gate splits are sublane-aligned slices; no in-loop lane shifts.
    h = jnp.zeros((H, Bt), jnp.float32)       # h0 = 0
    hs = []
    for t in range(T):
        gi = gi_all[t]                                                    # (24, Bt)
        gh = jnp.dot(whh, h, preferred_element_type=jnp.float32) + bhh    # (24, Bt)
        r = jax.nn.sigmoid(gi[0:H] + gh[0:H])
        z = jax.nn.sigmoid(gi[H:2 * H] + gh[H:2 * H])
        n = jnp.tanh(gi[2 * H:3 * H] + r * gh[2 * H:3 * H])
        h = (1.0 - z) * n + z * h
        hs.append(h)

    # ---- dense1 + dense2 as two single matmuls after the loop.
    # Row t*H + j of y is h_t[j] == column t*H + j of torch's reshape(B, H*T).
    y = jnp.concatenate(hs, axis=0)                                       # (T*H, Bt)
    d1 = jnp.dot(w1_ref[...], y, preferred_element_type=jnp.float32) + b1_ref[...]
    out_ref[...] = (jnp.dot(w2_ref[...], d1, preferred_element_type=jnp.float32)
                    + b2_ref[...])


def sensor_model_forward(x, params):
    """x: (B, clip_len, 1280 + 36). Returns (B, 6) float32."""
    B, T, _ = x.shape

    # Only the sensor columns are used by the module's forward; read just those
    # (small strided slice), cast to f32 and put batch on the minor (lane) axis.
    # The 1280 video columns are never touched by the kernel.
    sens = x[:, :, VID_DIM:].astype(jnp.float32)          # (B, T, 36)
    xt = jnp.transpose(sens, (1, 2, 0))                   # (T, 36, B)

    if B <= MAX_B_TILE:
        b_tile, b_pad = B, B          # single tile: block == full batch extent
    else:
        b_tile = MAX_B_TILE           # multiple of 128 -> lane-aligned tiles
        b_pad = ((B + b_tile - 1) // b_tile) * b_tile
    if b_pad != B:
        xt = jnp.pad(xt, ((0, 0), (0, 0), (0, b_pad - B)))

    wih = params["wih"]                                   # (24, 36)
    whh = params["whh"]                                   # (24, 8)
    bih = params["bih"].reshape(3 * HIDDEN, 1)
    bhh = params["bhh"].reshape(3 * HIDDEN, 1)
    w1 = params["w1"]                                     # (10, 8*T)
    b1 = params["b1"].reshape(D1_OUT, 1)
    w2 = params["w2"]                                     # (6, 10)
    b2 = params["b2"].reshape(D2_OUT, 1)

    out_t = pl.pallas_call(
        sensor_model_kernel,
        out_shape=jax.ShapeDtypeStruct((D2_OUT, b_pad), jnp.float32),
        grid=(b_pad // b_tile,),
        in_specs=[
            pl.BlockSpec((T, SENS_DIM, b_tile), lambda i: (0, 0, i)),
            pl.BlockSpec((3 * HIDDEN, SENS_DIM), lambda i: (0, 0)),
            pl.BlockSpec((3 * HIDDEN, 1), lambda i: (0, 0)),
            pl.BlockSpec((3 * HIDDEN, HIDDEN), lambda i: (0, 0)),
            pl.BlockSpec((3 * HIDDEN, 1), lambda i: (0, 0)),
            pl.BlockSpec((D1_OUT, HIDDEN * T), lambda i: (0, 0)),
            pl.BlockSpec((D1_OUT, 1), lambda i: (0, 0)),
            pl.BlockSpec((D2_OUT, D1_OUT), lambda i: (0, 0)),
            pl.BlockSpec((D2_OUT, 1), lambda i: (0, 0)),
        ],
        out_specs=pl.BlockSpec((D2_OUT, b_tile), lambda i: (0, i)),
        compiler_params=pltpu.CompilerParams(
            dimension_semantics=("parallel",)),
    )(xt, wih, bih, whh, bhh, w1, b1, w2, b2)

    return out_t[:, :B].T                                 # (B, 6)


def init_params(key, clip_len):
    """Parameter init matching the PyTorch default shapes / uniform ranges."""
    keys = jax.random.split(key, 8)
    kg = 1.0 / np.sqrt(HIDDEN)
    in1 = HIDDEN * clip_len
    k1 = 1.0 / np.sqrt(in1)
    k2 = 1.0 / np.sqrt(D1_OUT)
    return {
        # GRU, PyTorch layout: weight_ih (3H, 36), weight_hh (3H, H), gates [r,z,n]
        "wih": jax.random.uniform(keys[0], (3 * HIDDEN, SENS_DIM), jnp.float32, -kg, kg),
        "whh": jax.random.uniform(keys[1], (3 * HIDDEN, HIDDEN), jnp.float32, -kg, kg),
        "bih": jax.random.uniform(keys[2], (3 * HIDDEN,), jnp.float32, -kg, kg),
        "bhh": jax.random.uniform(keys[3], (3 * HIDDEN,), jnp.float32, -kg, kg),
        "w1": jax.random.uniform(keys[4], (D1_OUT, in1), jnp.float32, -k1, k1),
        "b1": jax.random.uniform(keys[5], (D1_OUT,), jnp.float32, -k1, k1),
        "w2": jax.random.uniform(keys[6], (D2_OUT, D1_OUT), jnp.float32, -k2, k2),
        "b2": jax.random.uniform(keys[7], (D2_OUT,), jnp.float32, -k2, k2),
    }


def reference_forward(x, params):
    """Pure-JAX reference replicating the PyTorch sensor_Model.forward exactly."""
    sens = x[:, :, VID_DIM:].astype(jnp.float32)
    B, T, _ = sens.shape
    H = HIDDEN

    def cell(h, xt):
        gi = xt @ params["wih"].T + params["bih"]
        gh = h @ params["whh"].T + params["bhh"]
        r = jax.nn.sigmoid(gi[:, :H] + gh[:, :H])
        z = jax.nn.sigmoid(gi[:, H:2 * H] + gh[:, H:2 * H])
        n = jnp.tanh(gi[:, 2 * H:] + r * gh[:, 2 * H:])
        h = (1.0 - z) * n + z * h
        return h, h

    h0 = jnp.zeros((B, H), jnp.float32)
    _, ys = lax.scan(cell, h0, jnp.transpose(sens, (1, 0, 2)))   # (T, B, H)
    y = jnp.transpose(ys, (1, 0, 2)).reshape(B, T * H)
    y = y @ params["w1"].T + params["b1"]
    y = y @ params["w2"].T + params["b2"]
    return y


if __name__ == "__main__":
    B, CLIP_LEN = 2, 8
    key = jax.random.PRNGKey(0)
    kx, kx2, kp = jax.random.split(key, 3)

    x = jax.random.normal(kx, (B, CLIP_LEN, VID_DIM + SENS_DIM), jnp.float32)
    params = init_params(kp, CLIP_LEN)

    fwd = jax.jit(sensor_model_forward)

    out = jax.block_until_ready(fwd(x, params))
    ref = reference_forward(x, params)
    assert out.shape == (B, D2_OUT)
    np.testing.assert_allclose(np.asarray(out), np.asarray(ref), rtol=1e-4, atol=1e-5)

    # Also exercise the tiled / padded batch path (grid of 2 tiles of 256).
    B2 = 384
    x2 = jax.random.normal(kx2, (B2, CLIP_LEN, VID_DIM + SENS_DIM), jnp.float32)
    out2 = jax.block_until_ready(fwd(x2, params))
    ref2 = reference_forward(x2, params)
    np.testing.assert_allclose(np.asarray(out2), np.asarray(ref2), rtol=1e-4, atol=1e-5)

    print("KERNEL_OK")
</pallas_src>

<mosaic_0001>
module attributes {stable_mosaic.version = 11 : i64} {
  func.func @sensor_model_kernel(%arg0: i32, %arg1: memref<8x36x2xf32, #tpu.memory_space<vmem>>, %arg2: memref<24x36xf32, #tpu.memory_space<vmem>>, %arg3: memref<24x1xf32, #tpu.memory_space<vmem>>, %arg4: memref<24x8xf32, #tpu.memory_space<vmem>>, %arg5: memref<24x1xf32, #tpu.memory_space<vmem>>, %arg6: memref<10x64xf32, #tpu.memory_space<vmem>>, %arg7: memref<10x1xf32, #tpu.memory_space<vmem>>, %arg8: memref<6x10xf32, #tpu.memory_space<vmem>>, %arg9: memref<6x1xf32, #tpu.memory_space<vmem>>, %arg10: memref<6x2xf32, #tpu.memory_space<vmem>>) attributes {dimension_semantics = [#tpu.dimension_semantics<parallel>], iteration_bounds = array<i64: 1>, scalar_prefetch = 0 : i64, scratch_operands = 0 : i64, tpu.core_type = #tpu.core_type<tc>, window_params = [{transform_indices = @transform_0, window_bounds = array<i64: 8, 36, 2>}, {pipeline_mode = #tpu.pipeline_mode<synchronous>, transform_indices = @transform_1, window_bounds = array<i64: 24, 36>}, {pipeline_mode = #tpu.pipeline_mode<synchronous>, transform_indices = @transform_2, window_bounds = array<i64: 24, 1>}, {pipeline_mode = #tpu.pipeline_mode<synchronous>, transform_indices = @transform_3, window_bounds = array<i64: 24, 8>}, {pipeline_mode = #tpu.pipeline_mode<synchronous>, transform_indices = @transform_4, window_bounds = array<i64: 24, 1>}, {pipeline_mode = #tpu.pipeline_mode<synchronous>, transform_indices = @transform_5, window_bounds = array<i64: 10, 64>}, {pipeline_mode = #tpu.pipeline_mode<synchronous>, transform_indices = @transform_6, window_bounds = array<i64: 10, 1>}, {pipeline_mode = #tpu.pipeline_mode<synchronous>, transform_indices = @transform_7, window_bounds = array<i64: 6, 10>}, {pipeline_mode = #tpu.pipeline_mode<synchronous>, transform_indices = @transform_8, window_bounds = array<i64: 6, 1>}, {transform_indices = @transform_9, window_bounds = array<i64: 6, 2>}]} {
    %c0 = arith.constant 0 : index
    %c0_0 = arith.constant 0 : index
    %0 = vector.load %arg2[%c0, %c0_0] : memref<24x36xf32, #tpu.memory_space<vmem>>, vector<24x36xf32>
    %1 = vector.shape_cast %0 : vector<24x36xf32> to vector<1x24x36xf32>
    %2 = vector.broadcast %1 : vector<1x24x36xf32> to vector<8x24x36xf32>
    %c0_1 = arith.constant 0 : index
    %c0_2 = arith.constant 0 : index
    %c0_3 = arith.constant 0 : index
    %3 = vector.load %arg1[%c0_1, %c0_2, %c0_3] : memref<8x36x2xf32, #tpu.memory_space<vmem>>, vector<8x36x2xf32>
    %cst = arith.constant dense<0.000000e+00> : vector<8x24x2xf32>
    %4 = tpu.matmul %2, %3, %cst {dimension_numbers = #tpu.dot_dimension_numbers<[2], [1], [1], [2], [0, 0, 0, 1, 1, 2], [0], [0]>} : vector<8x24x36xf32>, vector<8x36x2xf32>, vector<8x24x2xf32> -> vector<8x24x2xf32>
    %c0_4 = arith.constant 0 : index
    %c0_5 = arith.constant 0 : index
    %5 = vector.load %arg3[%c0_4, %c0_5] : memref<24x1xf32, #tpu.memory_space<vmem>>, vector<24x1xf32>
    %6 = vector.shape_cast %5 : vector<24x1xf32> to vector<1x24x1xf32>
    %7 = vector.broadcast %6 : vector<1x24x1xf32> to vector<8x24x2xf32>
    %8 = arith.addf %4, %7 : vector<8x24x2xf32>
    %c0_6 = arith.constant 0 : index
    %c0_7 = arith.constant 0 : index
    %9 = vector.load %arg4[%c0_6, %c0_7] : memref<24x8xf32, #tpu.memory_space<vmem>>, vector<24x8xf32>
    %c0_8 = arith.constant 0 : index
    %c0_9 = arith.constant 0 : index
    %10 = vector.load %arg5[%c0_8, %c0_9] : memref<24x1xf32, #tpu.memory_space<vmem>>, vector<24x1xf32>
    %cst_10 = arith.constant 0.000000e+00 : f32
    %11 = vector.broadcast %cst_10 : f32 to vector<8x2xf32>
    %12 = vector.extract_strided_slice %8 {offsets = [0, 0, 0], sizes = [1, 24, 2], strides = [1, 1, 1]} : vector<8x24x2xf32> to vector<1x24x2xf32>
    %13 = vector.shape_cast %12 : vector<1x24x2xf32> to vector<24x2xf32>
    %cst_11 = arith.constant dense<0.000000e+00> : vector<24x2xf32>
    %14 = tpu.matmul %9, %11, %cst_11 {dimension_numbers = #tpu.dot_dimension_numbers<[1], [0], [0], [1], [0, 0, 1, 1], [], []>} : vector<24x8xf32>, vector<8x2xf32>, vector<24x2xf32> -> vector<24x2xf32>
    %15 = vector.broadcast %10 : vector<24x1xf32> to vector<24x2xf32>
    %16 = arith.addf %14, %15 : vector<24x2xf32>
    %17 = vector.extract_strided_slice %13 {offsets = [0, 0], sizes = [8, 2], strides = [1, 1]} : vector<24x2xf32> to vector<8x2xf32>
    %18 = vector.extract_strided_slice %16 {offsets = [0, 0], sizes = [8, 2], strides = [1, 1]} : vector<24x2xf32> to vector<8x2xf32>
    %19 = arith.addf %17, %18 : vector<8x2xf32>
    %20 = arith.negf %19 : vector<8x2xf32>
    %21 = math.exp %20 : vector<8x2xf32>
    %cst_12 = arith.constant 1.000000e+00 : f32
    %22 = vector.broadcast %cst_12 : f32 to vector<8x2xf32>
    %23 = arith.addf %22, %21 : vector<8x2xf32>
    %24 = arith.divf %22, %23 : vector<8x2xf32>
    %25 = vector.extract_strided_slice %13 {offsets = [8, 0], sizes = [8, 2], strides = [1, 1]} : vector<24x2xf32> to vector<8x2xf32>
    %26 = vector.extract_strided_slice %16 {offsets = [8, 0], sizes = [8, 2], strides = [1, 1]} : vector<24x2xf32> to vector<8x2xf32>
    %27 = arith.addf %25, %26 : vector<8x2xf32>
    %28 = arith.negf %27 : vector<8x2xf32>
    %29 = math.exp %28 : vector<8x2xf32>
    %cst_13 = arith.constant 1.000000e+00 : f32
    %30 = vector.broadcast %cst_13 : f32 to vector<8x2xf32>
    %31 = arith.addf %30, %29 : vector<8x2xf32>
    %32 = arith.divf %30, %31 : vector<8x2xf32>
    %33 = vector.extract_strided_slice %13 {offsets = [16, 0], sizes = [8, 2], strides = [1, 1]} : vector<24x2xf32> to vector<8x2xf32>
    %34 = vector.extract_strided_slice %16 {offsets = [16, 0], sizes = [8, 2], strides = [1, 1]} : vector<24x2xf32> to vector<8x2xf32>
    %35 = arith.mulf %24, %34 : vector<8x2xf32>
    %36 = arith.addf %33, %35 : vector<8x2xf32>
    %37 = math.tanh %36 : vector<8x2xf32>
    %cst_14 = arith.constant 1.000000e+00 : f32
    %38 = vector.broadcast %cst_14 : f32 to vector<8x2xf32>
    %39 = arith.subf %38, %32 : vector<8x2xf32>
    %40 = arith.mulf %39, %37 : vector<8x2xf32>
    %41 = arith.mulf %32, %11 : vector<8x2xf32>
    %42 = arith.addf %40, %41 : vector<8x2xf32>
    %43 = vector.extract_strided_slice %8 {offsets = [1, 0, 0], sizes = [1, 24, 2], strides = [1, 1, 1]} : vector<8x24x2xf32> to vector<1x24x2xf32>
    %44 = vector.shape_cast %43 : vector<1x24x2xf32> to vector<24x2xf32>
    %cst_15 = arith.constant dense<0.000000e+00> : vector<24x2xf32>
    %45 = tpu.matmul %9, %42, %cst_15 {dimension_numbers = #tpu.dot_dimension_numbers<[1], [0], [0], [1], [0, 0, 1, 1], [], []>} : vector<24x8xf32>, vector<8x2xf32>, vector<24x2xf32> -> vector<24x2xf32>
    %46 = vector.broadcast %10 : vector<24x1xf32> to vector<24x2xf32>
    %47 = arith.addf %45, %46 : vector<24x2xf32>
    %48 = vector.extract_strided_slice %44 {offsets = [0, 0], sizes = [8, 2], strides = [1, 1]} : vector<24x2xf32> to vector<8x2xf32>
    %49 = vector.extract_strided_slice %47 {offsets = [0, 0], sizes = [8, 2], strides = [1, 1]} : vector<24x2xf32> to vector<8x2xf32>
    %50 = arith.addf %48, %49 : vector<8x2xf32>
    %51 = arith.negf %50 : vector<8x2xf32>
    %52 = math.exp %51 : vector<8x2xf32>
    %cst_16 = arith.constant 1.000000e+00 : f32
    %53 = vector.broadcast %cst_16 : f32 to vector<8x2xf32>
    %54 = arith.addf %53, %52 : vector<8x2xf32>
    %55 = arith.divf %53, %54 : vector<8x2xf32>
    %56 = vector.extract_strided_slice %44 {offsets = [8, 0], sizes = [8, 2], strides = [1, 1]} : vector<24x2xf32> to vector<8x2xf32>
    %57 = vector.extract_strided_slice %47 {offsets = [8, 0], sizes = [8, 2], strides = [1, 1]} : vector<24x2xf32> to vector<8x2xf32>
    %58 = arith.addf %56, %57 : vector<8x2xf32>
    %59 = arith.negf %58 : vector<8x2xf32>
    %60 = math.exp %59 : vector<8x2xf32>
    %cst_17 = arith.constant 1.000000e+00 : f32
    %61 = vector.broadcast %cst_17 : f32 to vector<8x2xf32>
    %62 = arith.addf %61, %60 : vector<8x2xf32>
    %63 = arith.divf %61, %62 : vector<8x2xf32>
    %64 = vector.extract_strided_slice %44 {offsets = [16, 0], sizes = [8, 2], strides = [1, 1]} : vector<24x2xf32> to vector<8x2xf32>
    %65 = vector.extract_strided_slice %47 {offsets = [16, 0], sizes = [8, 2], strides = [1, 1]} : vector<24x2xf32> to vector<8x2xf32>
    %66 = arith.mulf %55, %65 : vector<8x2xf32>
    %67 = arith.addf %64, %66 : vector<8x2xf32>
    %68 = math.tanh %67 : vector<8x2xf32>
    %cst_18 = arith.constant 1.000000e+00 : f32
    %69 = vector.broadcast %cst_18 : f32 to vector<8x2xf32>
    %70 = arith.subf %69, %63 : vector<8x2xf32>
    %71 = arith.mulf %70, %68 : vector<8x2xf32>
    %72 = arith.mulf %63, %42 : vector<8x2xf32>
    %73 = arith.addf %71, %72 : vector<8x2xf32>
    %74 = vector.extract_strided_slice %8 {offsets = [2, 0, 0], sizes = [1, 24, 2], strides = [1, 1, 1]} : vector<8x24x2xf32> to vector<1x24x2xf32>
    %75 = vector.shape_cast %74 : vector<1x24x2xf32> to vector<24x2xf32>
    %cst_19 = arith.constant dense<0.000000e+00> : vector<24x2xf32>
    %76 = tpu.matmul %9, %73, %cst_19 {dimension_numbers = #tpu.dot_dimension_numbers<[1], [0], [0], [1], [0, 0, 1, 1], [], []>} : vector<24x8xf32>, vector<8x2xf32>, vector<24x2xf32> -> vector<24x2xf32>
    %77 = vector.broadcast %10 : vector<24x1xf32> to vector<24x2xf32>
    %78 = arith.addf %76, %77 : vector<24x2xf32>
    %79 = vector.extract_strided_slice %75 {offsets = [0, 0], sizes = [8, 2], strides = [1, 1]} : vector<24x2xf32> to vector<8x2xf32>
    %80 = vector.extract_strided_slice %78 {offsets = [0, 0], sizes = [8, 2], strides = [1, 1]} : vector<24x2xf32> to vector<8x2xf32>
    %81 = arith.addf %79, %80 : vector<8x2xf32>
    %82 = arith.negf %81 : vector<8x2xf32>
    %83 = math.exp %82 : vector<8x2xf32>
    %cst_20 = arith.constant 1.000000e+00 : f32
    %84 = vector.broadcast %cst_20 : f32 to vector<8x2xf32>
    %85 = arith.addf %84, %83 : vector<8x2xf32>
    %86 = arith.divf %84, %85 : vector<8x2xf32>
    %87 = vector.extract_strided_slice %75 {offsets = [8, 0], sizes = [8, 2], strides = [1, 1]} : vector<24x2xf32> to vector<8x2xf32>
    %88 = vector.extract_strided_slice %78 {offsets = [8, 0], sizes = [8, 2], strides = [1, 1]} : vector<24x2xf32> to vector<8x2xf32>
    %89 = arith.addf %87, %88 : vector<8x2xf32>
    %90 = arith.negf %89 : vector<8x2xf32>
    %91 = math.exp %90 : vector<8x2xf32>
    %cst_21 = arith.constant 1.000000e+00 : f32
    %92 = vector.broadcast %cst_21 : f32 to vector<8x2xf32>
    %93 = arith.addf %92, %91 : vector<8x2xf32>
    %94 = arith.divf %92, %93 : vector<8x2xf32>
    %95 = vector.extract_strided_slice %75 {offsets = [16, 0], sizes = [8, 2], strides = [1, 1]} : vector<24x2xf32> to vector<8x2xf32>
    %96 = vector.extract_strided_slice %78 {offsets = [16, 0], sizes = [8, 2], strides = [1, 1]} : vector<24x2xf32> to vector<8x2xf32>
    %97 = arith.mulf %86, %96 : vector<8x2xf32>
    %98 = arith.addf %95, %97 : vector<8x2xf32>
    %99 = math.tanh %98 : vector<8x2xf32>
    %cst_22 = arith.constant 1.000000e+00 : f32
    %100 = vector.broadcast %cst_22 : f32 to vector<8x2xf32>
    %101 = arith.subf %100, %94 : vector<8x2xf32>
    %102 = arith.mulf %101, %99 : vector<8x2xf32>
    %103 = arith.mulf %94, %73 : vector<8x2xf32>
    %104 = arith.addf %102, %103 : vector<8x2xf32>
    %105 = vector.extract_strided_slice %8 {offsets = [3, 0, 0], sizes = [1, 24, 2], strides = [1, 1, 1]} : vector<8x24x2xf32> to vector<1x24x2xf32>
    %106 = vector.shape_cast %105 : vector<1x24x2xf32> to vector<24x2xf32>
    %cst_23 = arith.constant dense<0.000000e+00> : vector<24x2xf32>
    %107 = tpu.matmul %9, %104, %cst_23 {dimension_numbers = #tpu.dot_dimension_numbers<[1], [0], [0], [1], [0, 0, 1, 1], [], []>} : vector<24x8xf32>, vector<8x2xf32>, vector<24x2xf32> -> vector<24x2xf32>
    %108 = vector.broadcast %10 : vector<24x1xf32> to vector<24x2xf32>
    %109 = arith.addf %107, %108 : vector<24x2xf32>
    %110 = vector.extract_strided_slice %106 {offsets = [0, 0], sizes = [8, 2], strides = [1, 1]} : vector<24x2xf32> to vector<8x2xf32>
    %111 = vector.extract_strided_slice %109 {offsets = [0, 0], sizes = [8, 2], strides = [1, 1]} : vector<24x2xf32> to vector<8x2xf32>
    %112 = arith.addf %110, %111 : vector<8x2xf32>
    %113 = arith.negf %112 : vector<8x2xf32>
    %114 = math.exp %113 : vector<8x2xf32>
    %cst_24 = arith.constant 1.000000e+00 : f32
    %115 = vector.broadcast %cst_24 : f32 to vector<8x2xf32>
    %116 = arith.addf %115, %114 : vector<8x2xf32>
    %117 = arith.divf %115, %116 : vector<8x2xf32>
    %118 = vector.extract_strided_slice %106 {offsets = [8, 0], sizes = [8, 2], strides = [1, 1]} : vector<24x2xf32> to vector<8x2xf32>
    %119 = vector.extract_strided_slice %109 {offsets = [8, 0], sizes = [8, 2], strides = [1, 1]} : vector<24x2xf32> to vector<8x2xf32>
    %120 = arith.addf %118, %119 : vector<8x2xf32>
    %121 = arith.negf %120 : vector<8x2xf32>
    %122 = math.exp %121 : vector<8x2xf32>
    %cst_25 = arith.constant 1.000000e+00 : f32
    %123 = vector.broadcast %cst_25 : f32 to vector<8x2xf32>
    %124 = arith.addf %123, %122 : vector<8x2xf32>
    %125 = arith.divf %123, %124 : vector<8x2xf32>
    %126 = vector.extract_strided_slice %106 {offsets = [16, 0], sizes = [8, 2], strides = [1, 1]} : vector<24x2xf32> to vector<8x2xf32>
    %127 = vector.extract_strided_slice %109 {offsets = [16, 0], sizes = [8, 2], strides = [1, 1]} : vector<24x2xf32> to vector<8x2xf32>
    %128 = arith.mulf %117, %127 : vector<8x2xf32>
    %129 = arith.addf %126, %128 : vector<8x2xf32>
    %130 = math.tanh %129 : vector<8x2xf32>
    %cst_26 = arith.constant 1.000000e+00 : f32
    %131 = vector.broadcast %cst_26 : f32 to vector<8x2xf32>
    %132 = arith.subf %131, %125 : vector<8x2xf32>
    %133 = arith.mulf %132, %130 : vector<8x2xf32>
    %134 = arith.mulf %125, %104 : vector<8x2xf32>
    %135 = arith.addf %133, %134 : vector<8x2xf32>
    %136 = vector.extract_strided_slice %8 {offsets = [4, 0, 0], sizes = [1, 24, 2], strides = [1, 1, 1]} : vector<8x24x2xf32> to vector<1x24x2xf32>
    %137 = vector.shape_cast %136 : vector<1x24x2xf32> to vector<24x2xf32>
    %cst_27 = arith.constant dense<0.000000e+00> : vector<24x2xf32>
    %138 = tpu.matmul %9, %135, %cst_27 {dimension_numbers = #tpu.dot_dimension_numbers<[1], [0], [0], [1], [0, 0, 1, 1], [], []>} : vector<24x8xf32>, vector<8x2xf32>, vector<24x2xf32> -> vector<24x2xf32>
    %139 = vector.broadcast %10 : vector<24x1xf32> to vector<24x2xf32>
    %140 = arith.addf %138, %139 : vector<24x2xf32>
    %141 = vector.extract_strided_slice %137 {offsets = [0, 0], sizes = [8, 2], strides = [1, 1]} : vector<24x2xf32> to vector<8x2xf32>
    %142 = vector.extract_strided_slice %140 {offsets = [0, 0], sizes = [8, 2], strides = [1, 1]} : vector<24x2xf32> to vector<8x2xf32>
    %143 = arith.addf %141, %142 : vector<8x2xf32>
    %144 = arith.negf %143 : vector<8x2xf32>
    %145 = math.exp %144 : vector<8x2xf32>
    %cst_28 = arith.constant 1.000000e+00 : f32
    %146 = vector.broadcast %cst_28 : f32 to vector<8x2xf32>
    %147 = arith.addf %146, %145 : vector<8x2xf32>
    %148 = arith.divf %146, %147 : vector<8x2xf32>
    %149 = vector.extract_strided_slice %137 {offsets = [8, 0], sizes = [8, 2], strides = [1, 1]} : vector<24x2xf32> to vector<8x2xf32>
    %150 = vector.extract_strided_slice %140 {offsets = [8, 0], sizes = [8, 2], strides = [1, 1]} : vector<24x2xf32> to vector<8x2xf32>
    %151 = arith.addf %149, %150 : vector<8x2xf32>
    %152 = arith.negf %151 : vector<8x2xf32>
    %153 = math.exp %152 : vector<8x2xf32>
    %cst_29 = arith.constant 1.000000e+00 : f32
    %154 = vector.broadcast %cst_29 : f32 to vector<8x2xf32>
    %155 = arith.addf %154, %153 : vector<8x2xf32>
    %156 = arith.divf %154, %155 : vector<8x2xf32>
    %157 = vector.extract_strided_slice %137 {offsets = [16, 0], sizes = [8, 2], strides = [1, 1]} : vector<24x2xf32> to vector<8x2xf32>
    %158 = vector.extract_strided_slice %140 {offsets = [16, 0], sizes = [8, 2], strides = [1, 1]} : vector<24x2xf32> to vector<8x2xf32>
    %159 = arith.mulf %148, %158 : vector<8x2xf32>
    %160 = arith.addf %157, %159 : vector<8x2xf32>
    %161 = math.tanh %160 : vector<8x2xf32>
    %cst_30 = arith.constant 1.000000e+00 : f32
    %162 = vector.broadcast %cst_30 : f32 to vector<8x2xf32>
    %163 = arith.subf %162, %156 : vector<8x2xf32>
    %164 = arith.mulf %163, %161 : vector<8x2xf32>
    %165 = arith.mulf %156, %135 : vector<8x2xf32>
    %166 = arith.addf %164, %165 : vector<8x2xf32>
    %167 = vector.extract_strided_slice %8 {offsets = [5, 0, 0], sizes = [1, 24, 2], strides = [1, 1, 1]} : vector<8x24x2xf32> to vector<1x24x2xf32>
    %168 = vector.shape_cast %167 : vector<1x24x2xf32> to vector<24x2xf32>
    %cst_31 = arith.constant dense<0.000000e+00> : vector<24x2xf32>
    %169 = tpu.matmul %9, %166, %cst_31 {dimension_numbers = #tpu.dot_dimension_numbers<[1], [0], [0], [1], [0, 0, 1, 1], [], []>} : vector<24x8xf32>, vector<8x2xf32>, vector<24x2xf32> -> vector<24x2xf32>
    %170 = vector.broadcast %10 : vector<24x1xf32> to vector<24x2xf32>
    %171 = arith.addf %169, %170 : vector<24x2xf32>
    %172 = vector.extract_strided_slice %168 {offsets = [0, 0], sizes = [8, 2], strides = [1, 1]} : vector<24x2xf32> to vector<8x2xf32>
    %173 = vector.extract_strided_slice %171 {offsets = [0, 0], sizes = [8, 2], strides = [1, 1]} : vector<24x2xf32> to vector<8x2xf32>
    %174 = arith.addf %172, %173 : vector<8x2xf32>
    %175 = arith.negf %174 : vector<8x2xf32>
    %176 = math.exp %175 : vector<8x2xf32>
    %cst_32 = arith.constant 1.000000e+00 : f32
    %177 = vector.broadcast %cst_32 : f32 to vector<8x2xf32>
    %178 = arith.addf %177, %176 : vector<8x2xf32>
    %179 = arith.divf %177, %178 : vector<8x2xf32>
    %180 = vector.extract_strided_slice %168 {offsets = [8, 0], sizes = [8, 2], strides = [1, 1]} : vector<24x2xf32> to vector<8x2xf32>
    %181 = vector.extract_strided_slice %171 {offsets = [8, 0], sizes = [8, 2], strides = [1, 1]} : vector<24x2xf32> to vector<8x2xf32>
    %182 = arith.addf %180, %181 : vector<8x2xf32>
    %183 = arith.negf %182 : vector<8x2xf32>
    %184 = math.exp %183 : vector<8x2xf32>
    %cst_33 = arith.constant 1.000000e+00 : f32
    %185 = vector.broadcast %cst_33 : f32 to vector<8x2xf32>
    %186 = arith.addf %185, %184 : vector<8x2xf32>
    %187 = arith.divf %185, %186 : vector<8x2xf32>
    %188 = vector.extract_strided_slice %168 {offsets = [16, 0], sizes = [8, 2], strides = [1, 1]} : vector<24x2xf32> to vector<8x2xf32>
    %189 = vector.extract_strided_slice %171 {offsets = [16, 0], sizes = [8, 2], strides = [1, 1]} : vector<24x2xf32> to vector<8x2xf32>
    %190 = arith.mulf %179, %189 : vector<8x2xf32>
    %191 = arith.addf %188, %190 : vector<8x2xf32>
    %192 = math.tanh %191 : vector<8x2xf32>
    %cst_34 = arith.constant 1.000000e+00 : f32
    %193 = vector.broadcast %cst_34 : f32 to vector<8x2xf32>
    %194 = arith.subf %193, %187 : vector<8x2xf32>
    %195 = arith.mulf %194, %192 : vector<8x2xf32>
    %196 = arith.mulf %187, %166 : vector<8x2xf32>
    %197 = arith.addf %195, %196 : vector<8x2xf32>
    %198 = vector.extract_strided_slice %8 {offsets = [6, 0, 0], sizes = [1, 24, 2], strides = [1, 1, 1]} : vector<8x24x2xf32> to vector<1x24x2xf32>
    %199 = vector.shape_cast %198 : vector<1x24x2xf32> to vector<24x2xf32>
    %cst_35 = arith.constant dense<0.000000e+00> : vector<24x2xf32>
    %200 = tpu.matmul %9, %197, %cst_35 {dimension_numbers = #tpu.dot_dimension_numbers<[1], [0], [0], [1], [0, 0, 1, 1], [], []>} : vector<24x8xf32>, vector<8x2xf32>, vector<24x2xf32> -> vector<24x2xf32>
    %201 = vector.broadcast %10 : vector<24x1xf32> to vector<24x2xf32>
    %202 = arith.addf %200, %201 : vector<24x2xf32>
    %203 = vector.extract_strided_slice %199 {offsets = [0, 0], sizes = [8, 2], strides = [1, 1]} : vector<24x2xf32> to vector<8x2xf32>
    %204 = vector.extract_strided_slice %202 {offsets = [0, 0], sizes = [8, 2], strides = [1, 1]} : vector<24x2xf32> to vector<8x2xf32>
    %205 = arith.addf %203, %204 : vector<8x2xf32>
    %206 = arith.negf %205 : vector<8x2xf32>
    %207 = math.exp %206 : vector<8x2xf32>
    %cst_36 = arith.constant 1.000000e+00 : f32
    %208 = vector.broadcast %cst_36 : f32 to vector<8x2xf32>
    %209 = arith.addf %208, %207 : vector<8x2xf32>
    %210 = arith.divf %208, %209 : vector<8x2xf32>
    %211 = vector.extract_strided_slice %199 {offsets = [8, 0], sizes = [8, 2], strides = [1, 1]} : vector<24x2xf32> to vector<8x2xf32>
    %212 = vector.extract_strided_slice %202 {offsets = [8, 0], sizes = [8, 2], strides = [1, 1]} : vector<24x2xf32> to vector<8x2xf32>
    %213 = arith.addf %211, %212 : vector<8x2xf32>
    %214 = arith.negf %213 : vector<8x2xf32>
    %215 = math.exp %214 : vector<8x2xf32>
    %cst_37 = arith.constant 1.000000e+00 : f32
    %216 = vector.broadcast %cst_37 : f32 to vector<8x2xf32>
    %217 = arith.addf %216, %215 : vector<8x2xf32>
    %218 = arith.divf %216, %217 : vector<8x2xf32>
    %219 = vector.extract_strided_slice %199 {offsets = [16, 0], sizes = [8, 2], strides = [1, 1]} : vector<24x2xf32> to vector<8x2xf32>
    %220 = vector.extract_strided_slice %202 {offsets = [16, 0], sizes = [8, 2], strides = [1, 1]} : vector<24x2xf32> to vector<8x2xf32>
    %221 = arith.mulf %210, %220 : vector<8x2xf32>
    %222 = arith.addf %219, %221 : vector<8x2xf32>
    %223 = math.tanh %222 : vector<8x2xf32>
    %cst_38 = arith.constant 1.000000e+00 : f32
    %224 = vector.broadcast %cst_38 : f32 to vector<8x2xf32>
    %225 = arith.subf %224, %218 : vector<8x2xf32>
    %226 = arith.mulf %225, %223 : vector<8x2xf32>
    %227 = arith.mulf %218, %197 : vector<8x2xf32>
    %228 = arith.addf %226, %227 : vector<8x2xf32>
    %229 = vector.extract_strided_slice %8 {offsets = [7, 0, 0], sizes = [1, 24, 2], strides = [1, 1, 1]} : vector<8x24x2xf32> to vector<1x24x2xf32>
    %230 = vector.shape_cast %229 : vector<1x24x2xf32> to vector<24x2xf32>
    %cst_39 = arith.constant dense<0.000000e+00> : vector<24x2xf32>
    %231 = tpu.matmul %9, %228, %cst_39 {dimension_numbers = #tpu.dot_dimension_numbers<[1], [0], [0], [1], [0, 0, 1, 1], [], []>} : vector<24x8xf32>, vector<8x2xf32>, vector<24x2xf32> -> vector<24x2xf32>
    %232 = vector.broadcast %10 : vector<24x1xf32> to vector<24x2xf32>
    %233 = arith.addf %231, %232 : vector<24x2xf32>
    %234 = vector.extract_strided_slice %230 {offsets = [0, 0], sizes = [8, 2], strides = [1, 1]} : vector<24x2xf32> to vector<8x2xf32>
    %235 = vector.extract_strided_slice %233 {offsets = [0, 0], sizes = [8, 2], strides = [1, 1]} : vector<24x2xf32> to vector<8x2xf32>
    %236 = arith.addf %234, %235 : vector<8x2xf32>
    %237 = arith.negf %236 : vector<8x2xf32>
    %238 = math.exp %237 : vector<8x2xf32>
    %cst_40 = arith.constant 1.000000e+00 : f32
    %239 = vector.broadcast %cst_40 : f32 to vector<8x2xf32>
    %240 = arith.addf %239, %238 : vector<8x2xf32>
    %241 = arith.divf %239, %240 : vector<8x2xf32>
    %242 = vector.extract_strided_slice %230 {offsets = [8, 0], sizes = [8, 2], strides = [1, 1]} : vector<24x2xf32> to vector<8x2xf32>
    %243 = vector.extract_strided_slice %233 {offsets = [8, 0], sizes = [8, 2], strides = [1, 1]} : vector<24x2xf32> to vector<8x2xf32>
    %244 = arith.addf %242, %243 : vector<8x2xf32>
    %245 = arith.negf %244 : vector<8x2xf32>
    %246 = math.exp %245 : vector<8x2xf32>
    %cst_41 = arith.constant 1.000000e+00 : f32
    %247 = vector.broadcast %cst_41 : f32 to vector<8x2xf32>
    %248 = arith.addf %247, %246 : vector<8x2xf32>
    %249 = arith.divf %247, %248 : vector<8x2xf32>
    %250 = vector.extract_strided_slice %230 {offsets = [16, 0], sizes = [8, 2], strides = [1, 1]} : vector<24x2xf32> to vector<8x2xf32>
    %251 = vector.extract_strided_slice %233 {offsets = [16, 0], sizes = [8, 2], strides = [1, 1]} : vector<24x2xf32> to vector<8x2xf32>
    %252 = arith.mulf %241, %251 : vector<8x2xf32>
    %253 = arith.addf %250, %252 : vector<8x2xf32>
    %254 = math.tanh %253 : vector<8x2xf32>
    %cst_42 = arith.constant 1.000000e+00 : f32
    %255 = vector.broadcast %cst_42 : f32 to vector<8x2xf32>
    %256 = arith.subf %255, %249 : vector<8x2xf32>
    %257 = arith.mulf %256, %254 : vector<8x2xf32>
    %258 = arith.mulf %249, %228 : vector<8x2xf32>
    %259 = arith.addf %257, %258 : vector<8x2xf32>
    %260 = tpu.concatenate %42, %73, %104, %135, %166, %197, %228, %259 in 0 : vector<8x2xf32>, vector<8x2xf32>, vector<8x2xf32>, vector<8x2xf32>, vector<8x2xf32>, vector<8x2xf32>, vector<8x2xf32>, vector<8x2xf32> -> vector<64x2xf32>
    %c0_43 = arith.constant 0 : index
    %c0_44 = arith.constant 0 : index
    %261 = vector.load %arg6[%c0_43, %c0_44] : memref<10x64xf32, #tpu.memory_space<vmem>>, vector<10x64xf32>
    %cst_45 = arith.constant dense<0.000000e+00> : vector<10x2xf32>
    %262 = tpu.matmul %261, %260, %cst_45 {dimension_numbers = #tpu.dot_dimension_numbers<[1], [0], [0], [1], [0, 0, 1, 1], [], []>} : vector<10x64xf32>, vector<64x2xf32>, vector<10x2xf32> -> vector<10x2xf32>
    %c0_46 = arith.constant 0 : index
    %c0_47 = arith.constant 0 : index
    %263 = vector.load %arg7[%c0_46, %c0_47] : memref<10x1xf32, #tpu.memory_space<vmem>>, vector<10x1xf32>
    %264 = vector.broadcast %263 : vector<10x1xf32> to vector<10x2xf32>
    %265 = arith.addf %262, %264 : vector<10x2xf32>
    %c0_48 = arith.constant 0 : index
    %c0_49 = arith.constant 0 : index
    %266 = vector.load %arg8[%c0_48, %c0_49] : memref<6x10xf32, #tpu.memory_space<vmem>>, vector<6x10xf32>
    %cst_50 = arith.constant dense<0.000000e+00> : vector<6x2xf32>
    %267 = tpu.matmul %266, %265, %cst_50 {dimension_numbers = #tpu.dot_dimension_numbers<[1], [0], [0], [1], [0, 0, 1, 1], [], []>} : vector<6x10xf32>, vector<10x2xf32>, vector<6x2xf32> -> vector<6x2xf32>
    %c0_51 = arith.constant 0 : index
    %c0_52 = arith.constant 0 : index
    %268 = vector.load %arg9[%c0_51, %c0_52] : memref<6x1xf32, #tpu.memory_space<vmem>>, vector<6x1xf32>
    %269 = vector.broadcast %268 : vector<6x1xf32> to vector<6x2xf32>
    %270 = arith.addf %267, %269 : vector<6x2xf32>
    %c0_53 = arith.constant 0 : index
    %c0_54 = arith.constant 0 : index
    %271 = vector.load %arg10[%c0_53, %c0_54] : memref<6x2xf32, #tpu.memory_space<vmem>>, vector<6x2xf32>
    tpu.vector_store %arg10[%c0_53, %c0_54], %270 {strides = array<i32>} : memref<6x2xf32, #tpu.memory_space<vmem>>, vector<6x2xf32>,
    return
  }
  func.func @transform_0(%arg0: i32) -> (i32, i32, i32) {
    %c0_i32 = arith.constant 0 : i32
    %c0_i32_0 = arith.constant 0 : i32
    %c0_i32_1 = arith.constant 0 : i32
    return %c0_i32, %c0_i32_0, %arg0 : i32, i32, i32
  }
  func.func @transform_1(%arg0: i32) -> (i32, i32) {
    %c0_i32 = arith.constant 0 : i32
    %c0_i32_0 = arith.constant 0 : i32
    %c0_i32_1 = arith.constant 0 : i32
    return %c0_i32, %c0_i32_0 : i32, i32
  }
  func.func @transform_2(%arg0: i32) -> (i32, i32) {
    %c0_i32 = arith.constant 0 : i32
    %c0_i32_0 = arith.constant 0 : i32
    %c0_i32_1 = arith.constant 0 : i32
    return %c0_i32, %c0_i32_0 : i32, i32
  }
  func.func @transform_3(%arg0: i32) -> (i32, i32) {
    %c0_i32 = arith.constant 0 : i32
    %c0_i32_0 = arith.constant 0 : i32
    %c0_i32_1 = arith.constant 0 : i32
    return %c0_i32, %c0_i32_0 : i32, i32
  }
  func.func @transform_4(%arg0: i32) -> (i32, i32) {
    %c0_i32 = arith.constant 0 : i32
    %c0_i32_0 = arith.constant 0 : i32
    %c0_i32_1 = arith.constant 0 : i32
    return %c0_i32, %c0_i32_0 : i32, i32
  }
  func.func @transform_5(%arg0: i32) -> (i32, i32) {
    %c0_i32 = arith.constant 0 : i32
    %c0_i32_0 = arith.constant 0 : i32
    %c0_i32_1 = arith.constant 0 : i32
    return %c0_i32, %c0_i32_0 : i32, i32
  }
  func.func @transform_6(%arg0: i32) -> (i32, i32) {
    %c0_i32 = arith.constant 0 : i32
    %c0_i32_0 = arith.constant 0 : i32
    %c0_i32_1 = arith.constant 0 : i32
    return %c0_i32, %c0_i32_0 : i32, i32
  }
  func.func @transform_7(%arg0: i32) -> (i32, i32) {
    %c0_i32 = arith.constant 0 : i32
    %c0_i32_0 = arith.constant 0 : i32
    %c0_i32_1 = arith.constant 0 : i32
    return %c0_i32, %c0_i32_0 : i32, i32
  }
  func.func @transform_8(%arg0: i32) -> (i32, i32) {
    %c0_i32 = arith.constant 0 : i32
    %c0_i32_0 = arith.constant 0 : i32
    %c0_i32_1 = arith.constant 0 : i32
    return %c0_i32, %c0_i32_0 : i32, i32
  }
  func.func @transform_9(%arg0: i32) -> (i32, i32) {
    %c0_i32 = arith.constant 0 : i32
    %c0_i32_0 = arith.constant 0 : i32
    return %c0_i32, %arg0 : i32, i32
  }
}

</mosaic_0001>

<llo_original>
// kernel: sensor_model_forward.1
$region0: #{sensor_model_forward.1}
  #allocation0 [shape = 'u32[]', space=smem, size = 0x4, offset = 0x4, fixed_abs, tag = 'smem constant byte address 0x4 - core index']
  #allocation1 [shape = 'u32[144,128]{1,0:T(1,128)}', space=vmem, size = 0x12000, scoped, tag = 'internal scratch']
  %s0 = inlined_call_operand.vmem [shape: f32[8,36,2], index: 0, kind: input, shape index: {}]
  %s1 = inlined_call_operand.vmem [shape: f32[24,36], index: 1, kind: input, shape index: {}]
  %s2 = inlined_call_operand.vmem [shape: f32[24,1], index: 2, kind: input, shape index: {}]
  %s3 = inlined_call_operand.vmem [shape: f32[24,8], index: 3, kind: input, shape index: {}]
  %s4 = inlined_call_operand.vmem [shape: f32[24,1], index: 4, kind: input, shape index: {}]
  %s5 = inlined_call_operand.vmem [shape: f32[10,64], index: 5, kind: input, shape index: {}]
  %s6 = inlined_call_operand.vmem [shape: f32[10,1], index: 6, kind: input, shape index: {}]
  %s7 = inlined_call_operand.vmem [shape: f32[6,10], index: 7, kind: input, shape index: {}]
  %s8 = inlined_call_operand.vmem [shape: f32[6,1], index: 8, kind: input, shape index: {}]
  %s9 = inlined_call_operand.vmem [shape: f32[6,2], index: 9, kind: output, shape index: {}]
  %s10 = sld [smem:[#allocation0]]
  $region46: #{sensor_model_forward.1} parent=0
    _
  %s12 = ssub.s32 1, %s10
  %s13 = scalar_select 0, %s12, %s10
  // Predicated region
  $region2: #{sensor_model_forward.1} parent=0 // pred_check
    _
  $region3: #{sensor_model_forward.1} parent=0 // pred_check_branch
    %15 = sbr.rel (0) target = $region5
  $region4: #{sensor_model_forward.1} parent=0 // pred_region
    _
  $region5: #{sensor_model_forward.1} parent=0 // pred_fallthru
    _
  // Predicated region
  $region6: #{sensor_model_forward.1} parent=0 // pred_check
    _
  $region7: #{sensor_model_forward.1} parent=0 // pred_check_branch
    %17 = sbr.rel (0) target = $region9
  $region8: #{sensor_model_forward.1} parent=0 // pred_region
    _
  $region9: #{sensor_model_forward.1} parent=0 // pred_fallthru
    _
  // Predicated region
  $region10: #{sensor_model_forward.1} parent=0 // pred_check
    _
  $region11: #{sensor_model_forward.1} parent=0 // pred_check_branch
    %19 = sbr.rel (0) target = $region13
  $region12: #{sensor_model_forward.1} parent=0 // pred_region
    _
  $region13: #{sensor_model_forward.1} parent=0 // pred_fallthru
    _
  // Predicated region
  $region14: #{sensor_model_forward.1} parent=0 // pred_check
    _
  $region15: #{sensor_model_forward.1} parent=0 // pred_check_branch
    %21 = sbr.rel (0) target = $region17
  $region16: #{sensor_model_forward.1} parent=0 // pred_region
    _
  $region17: #{sensor_model_forward.1} parent=0 // pred_fallthru
    _
  // Predicated region
  $region18: #{sensor_model_forward.1} parent=0 // pred_check
    _
  $region19: #{sensor_model_forward.1} parent=0 // pred_check_branch
    %23 = sbr.rel (0) target = $region21
  $region20: #{sensor_model_forward.1} parent=0 // pred_region
    _
  $region21: #{sensor_model_forward.1} parent=0 // pred_fallthru
    _
  // Predicated region
  $region22: #{sensor_model_forward.1} parent=0 // pred_check
    _
  $region23: #{sensor_model_forward.1} parent=0 // pred_check_branch
    %25 = sbr.rel (0) target = $region25
  $region24: #{sensor_model_forward.1} parent=0 // pred_region
    _
  $region25: #{sensor_model_forward.1} parent=0 // pred_fallthru
    _
  // Predicated region
  $region26: #{sensor_model_forward.1} parent=0 // pred_check
    _
  $region27: #{sensor_model_forward.1} parent=0 // pred_check_branch
    %27 = sbr.rel (0) target = $region29
  $region28: #{sensor_model_forward.1} parent=0 // pred_region
    _
  $region29: #{sensor_model_forward.1} parent=0 // pred_fallthru
    _
  // Predicated region
  $region30: #{sensor_model_forward.1} parent=0 // pred_check
    _
  $region31: #{sensor_model_forward.1} parent=0 // pred_check_branch
    %29 = sbr.rel (0) target = $region33
  $region32: #{sensor_model_forward.1} parent=0 // pred_region
    _
  $region33: #{sensor_model_forward.1} parent=0 // pred_fallthru
    _
  // Predicated region
  $region34: #{sensor_model_forward.1} parent=0 // pred_check
    _
  $region35: #{sensor_model_forward.1} parent=0 // pred_check_branch
    %31 = sbr.rel (0) target = $region37
  $region36: #{sensor_model_forward.1} parent=0 // pred_region
    _
  $region37: #{sensor_model_forward.1} parent=0 // pred_fallthru
    _
  %v32 = vld [vmem:[%s1] sm:$0xff]
  %v33 = vld [vmem:[%s1 + $0x8] sm:$0xff]
  %v34 = vld [vmem:[%s1 + $0x10] sm:$0xff]
  %v35 = vld [vmem:[%s0] sm:$0xff]
  %v36 = vld [vmem:[%s0 + $0x8] sm:$0xff]
  %v37 = vld [vmem:[%s0 + $0x10] sm:$0xff]
  %v38 = vld [vmem:[%s0 + $0x18] sm:$0xff]
  %v39 = vld [vmem:[%s0 + $0x20] sm:$0xf]
  %v40 = vld [vmem:[%s0 + $0x28] sm:$0xff]
  %v41 = vld [vmem:[%s0 + $0x30] sm:$0xff]
  %v42 = vld [vmem:[%s0 + $0x38] sm:$0xff]
  %v43 = vld [vmem:[%s0 + $0x40] sm:$0xff]
  %v44 = vld [vmem:[%s0 + $0x48] sm:$0xf]
  %v45 = vld [vmem:[%s0 + $0x50] sm:$0xff]
  %v46 = vld [vmem:[%s0 + $0x58] sm:$0xff]
  %v47 = vld [vmem:[%s0 + $0x60] sm:$0xff]
  %v48 = vld [vmem:[%s0 + $0x68] sm:$0xff]
  %v49 = vld [vmem:[%s0 + $0x70] sm:$0xf]
  %v50 = vld [vmem:[%s0 + $0x78] sm:$0xff]
  %v51 = vld [vmem:[%s0 + $0x80] sm:$0xff]
  %v52 = vld [vmem:[%s0 + $0x88] sm:$0xff]
  %v53 = vld [vmem:[%s0 + $0x90] sm:$0xff]
  %v54 = vld [vmem:[%s0 + $0x98] sm:$0xf]
  %v55 = vld [vmem:[%s0 + $0xa0] sm:$0xff]
  %v56 = vld [vmem:[%s0 + $0xa8] sm:$0xff]
  %v57 = vld [vmem:[%s0 + $0xb0] sm:$0xff]
  %v58 = vld [vmem:[%s0 + $0xb8] sm:$0xff]
  %v59 = vld [vmem:[%s0 + $0xc0] sm:$0xf]
  %v60 = vld [vmem:[%s0 + $0xc8] sm:$0xff]
  %v61 = vld [vmem:[%s0 + $0xd0] sm:$0xff]
  %v62 = vld [vmem:[%s0 + $0xd8] sm:$0xff]
  %v63 = vld [vmem:[%s0 + $0xe0] sm:$0xff]
  %v64 = vld [vmem:[%s0 + $0xe8] sm:$0xf]
  %v65 = vld [vmem:[%s0 + $0xf0] sm:$0xff]
  %v66 = vld [vmem:[%s0 + $0xf8] sm:$0xff]
  %v67 = vld [vmem:[%s0 + $0x100] sm:$0xff]
  %v68 = vld [vmem:[%s0 + $0x108] sm:$0xff]
  %v69 = vld [vmem:[%s0 + $0x110] sm:$0xf]
  %v70 = vld [vmem:[%s0 + $0x118] sm:$0xff]
  %v71 = vld [vmem:[%s0 + $0x120] sm:$0xff]
  %v72 = vld [vmem:[%s0 + $0x128] sm:$0xff]
  %v73 = vld [vmem:[%s0 + $0x130] sm:$0xff]
  %v74 = vld [vmem:[%s0 + $0x138] sm:$0xf]
  %v75 = vld [vmem:[%s2] sm:$0xff]
  %v76 = vld [vmem:[%s2 + $0x8] sm:$0xff]
  %v77 = vld [vmem:[%s2 + $0x10] sm:$0xff]
  %79 = vset.pattern.permute.xlu0 0
  %80 = vperm.xlu0 %79, %v75
  %v81 = vpop.permute.xlu0 %80
  %84 = vset.pattern.permute.xlu0 0
  %85 = vperm.xlu0 %84, %v76
  %v86 = vpop.permute.xlu0 %85
  %89 = vset.pattern.permute.xlu0 0
  %90 = vperm.xlu0 %89, %v77
  %v91 = vpop.permute.xlu0 %90
  %vm93 = vcmask 293888
  %v95 = vsel %vm93, %v32, 0
  %v98 = vsel %vm93, %v33, 0
  %v101 = vsel %vm93, %v34, 0
  %vm103 = vcmask 1043456
  %v105 = vsel %vm103, %v39, 0
  %107 = vmatprep.subr.mxu0 0.0
  %108 = vmatpush1.msra.mxu0 %v35
  %109 = vmatprep.subr.mxu0 0.0
  %110 = vmatpush1.msra.mxu0 %v36
  %111 = vmatprep.subr.mxu0 0.0
  %112 = vmatpush1.msra.mxu0 %v37
  %113 = vmatprep.subr.mxu0 0.0
  %114 = vmatpush1.msra.mxu0 %v38
  %115 = vmatprep.subr.mxu0 0.0
  %116 = vmatpush1.msra.mxu0 %v105
  %117 = vmatprep.subr.mxu0 0.0
  %118 = vmatpush1.msra.mxu0 0.0
  %119 = vmatprep.subr.mxu0 0.0
  %120 = vmatpush1.msra.mxu0 0.0
  %121 = vmatprep.subr.mxu0 0.0
  %122 = vmatpush1.msra.mxu0 0.0
  %123 = vmatprep.subr.mxu0 0.0
  %124 = vmatpush1.msra.mxu0 0.0
  %125 = vmatprep.subr.mxu0 0.0
  %126 = vmatpush1.msra.mxu0 0.0
  %127 = vmatprep.subr.mxu0 0.0
  %128 = vmatpush1.msra.mxu0 0.0
  %129 = vmatprep.subr.mxu0 0.0
  %130 = vmatpush1.msra.mxu0 0.0
  %131 = vmatprep.subr.mxu0 0.0
  %132 = vmatpush1.msra.mxu0 0.0
  %133 = vmatprep.subr.mxu0 0.0
  %134 = vmatpush1.msra.mxu0 0.0
  %135 = vmatprep.subr.mxu0 0.0
  %136 = vmatpush1.msra.mxu0 0.0
  %137 = vmatprep.subr.mxu0 0.0
  %138 = vmatpush1.msra.mxu0 0.0
  %139 = vmatprep.subr.mxu0 0.0
  %140 = vmatpush1.msra.mxu0 0.0
  %141 = vmatprep.subr.mxu0 0.0
  %142 = vmatpush1.msra.mxu0 0.0
  %143 = vmatprep.subr.mxu0 0.0
  %144 = vmatpush1.msra.mxu0 0.0
  %145 = vmatprep.subr.mxu0 0.0
  %146 = vmatpush1.msra.mxu0 0.0
  %147 = vmatprep.subr.mxu0 0.0
  %148 = vmatpush1.msra.mxu0 0.0
  %149 = vmatprep.subr.mxu0 0.0
  %150 = vmatpush1.msra.mxu0 0.0
  %151 = vmatprep.subr.mxu0 0.0
  %152 = vmatpush1.msra.mxu0 0.0
  %153 = vmatprep.subr.mxu0 0.0
  %154 = vmatpush1.msra.mxu0 0.0
  %155 = vmatprep.subr.mxu0 0.0
  %156 = vmatpush1.msra.mxu0 0.0
  %157 = vmatprep.subr.mxu0 0.0
  %158 = vmatpush1.msra.mxu0 0.0
  %159 = vmatprep.subr.mxu0 0.0
  %160 = vmatpush1.msra.mxu0 0.0
  %161 = vmatprep.subr.mxu0 0.0
  %162 = vmatpush1.msra.mxu0 0.0
  %163 = vmatprep.subr.mxu0 0.0
  %164 = vmatpush1.msra.mxu0 0.0
  %165 = vmatprep.subr.mxu0 0.0
  %166 = vmatpush1.msra.mxu0 0.0
  %167 = vmatprep.subr.mxu0 0.0
  %168 = vmatpush1.msra.mxu0 0.0
  %169 = vmatprep.subr.mxu0 0.0
  %170 = vmatpush1.msra.mxu0 0.0
  %171 = vmatprep.mubr.f32.mxu0 0.0
  %172 = vmatmul.mubr.f32.gmra.mrb[0].mxu0 %v95
  %v173 = vpop.f32.mrb[0].mxu0
  %v174 = vadd.f32 %v81, %v173
  %v175 = vpop.f32.mrb[0].mxu0
  %176 = vmatprep.mubr.f32.mxu0 0.0
  %177 = vmatmul.mubr.f32.gmra.mrb[0].mxu0 %v98
  %v178 = vpop.f32.mrb[0].mxu0
  %v179 = vadd.f32 %v86, %v178
  %v180 = vpop.f32.mrb[0].mxu0
  %181 = vmatprep.mubr.f32.mxu0 0.0
  %182 = vmatmul.mubr.f32.gmra.mrb[0].mxu0 %v101
  %v183 = vpop.f32.mrb[0].mxu0
  %v184 = vadd.f32 %v91, %v183
  %v185 = vpop.f32.mrb[0].mxu0
  %186 = vdwg.mxu0
  %v188 = vsel %vm103, %v44, 0
  %190 = vmatprep.subr.mxu0 0.0
  %191 = vmatpush1.msra.mxu0 %v40
  %192 = vmatprep.subr.mxu0 0.0
  %193 = vmatpush1.msra.mxu0 %v41
  %194 = vmatprep.subr.mxu0 0.0
  %195 = vmatpush1.msra.mxu0 %v42
  %196 = vmatprep.subr.mxu0 0.0
  %197 = vmatpush1.msra.mxu0 %v43
  %198 = vmatprep.subr.mxu0 0.0
  %199 = vmatpush1.msra.mxu0 %v188
  %200 = vmatprep.subr.mxu0 0.0
  %201 = vmatpush1.msra.mxu0 0.0
  %202 = vmatprep.subr.mxu0 0.0
  %203 = vmatpush1.msra.mxu0 0.0
  %204 = vmatprep.subr.mxu0 0.0
  %205 = vmatpush1.msra.mxu0 0.0
  %206 = vmatprep.subr.mxu0 0.0
  %207 = vmatpush1.msra.mxu0 0.0
  %208 = vmatprep.subr.mxu0 0.0
  %209 = vmatpush1.msra.mxu0 0.0
  %210 = vmatprep.subr.mxu0 0.0
  %211 = vmatpush1.msra.mxu0 0.0
  %212 = vmatprep.subr.mxu0 0.0
  %213 = vmatpush1.msra.mxu0 0.0
  %214 = vmatprep.subr.mxu0 0.0
  %215 = vmatpush1.msra.mxu0 0.0
  %216 = vmatprep.subr.mxu0 0.0
  %217 = vmatpush1.msra.mxu0 0.0
  %218 = vmatprep.subr.mxu0 0.0
  %219 = vmatpush1.msra.mxu0 0.0
  %220 = vmatprep.subr.mxu0 0.0
  %221 = vmatpush1.msra.mxu0 0.0
  %222 = vmatprep.subr.mxu0 0.0
  %223 = vmatpush1.msra.mxu0 0.0
  %224 = vmatprep.subr.mxu0 0.0
  %225 = vmatpush1.msra.mxu0 0.0
  %226 = vmatprep.subr.mxu0 0.0
  %227 = vmatpush1.msra.mxu0 0.0
  %228 = vmatprep.subr.mxu0 0.0
  %229 = vmatpush1.msra.mxu0 0.0
  %230 = vmatprep.subr.mxu0 0.0
  %231 = vmatpush1.msra.mxu0 0.0
  %232 = vmatprep.subr.mxu0 0.0
  %233 = vmatpush1.msra.mxu0 0.0
  %234 = vmatprep.subr.mxu0 0.0
  %235 = vmatpush1.msra.mxu0 0.0
  %236 = vmatprep.subr.mxu0 0.0
  %237 = vmatpush1.msra.mxu0 0.0
  %238 = vmatprep.subr.mxu0 0.0
  %239 = vmatpush1.msra.mxu0 0.0
  %240 = vmatprep.subr.mxu0 0.0
  %241 = vmatpush1.msra.mxu0 0.0
  %242 = vmatprep.subr.mxu0 0.0
  %243 = vmatpush1.msra.mxu0 0.0
  %244 = vmatprep.subr.mxu0 0.0
  %245 = vmatpush1.msra.mxu0 0.0
  %246 = vmatprep.subr.mxu0 0.0
  %247 = vmatpush1.msra.mxu0 0.0
  %248 = vmatprep.subr.mxu0 0.0
  %249 = vmatpush1.msra.mxu0 0.0
  %250 = vmatprep.subr.mxu0 0.0
  %251 = vmatpush1.msra.mxu0 0.0
  %252 = vmatprep.subr.mxu0 0.0
  %253 = vmatpush1.msra.mxu0 0.0
  %254 = vmatprep.mubr.f32.mxu0 0.0
  %255 = vmatmul.mubr.f32.gmra.mrb[0].mxu0 %v95
  %v256 = vpop.f32.mrb[0].mxu0
  %v257 = vadd.f32 %v81, %v256
  %v258 = vpop.f32.mrb[0].mxu0
  %259 = vmatprep.mubr.f32.mxu0 0.0
  %260 = vmatmul.mubr.f32.gmra.mrb[0].mxu0 %v98
  %v261 = vpop.f32.mrb[0].mxu0
  %v262 = vadd.f32 %v86, %v261
  %v263 = vpop.f32.mrb[0].mxu0
  %264 = vmatprep.mubr.f32.mxu0 0.0
  %265 = vmatmul.mubr.f32.gmra.mrb[0].mxu0 %v101
  %v266 = vpop.f32.mrb[0].mxu0
  %v267 = vadd.f32 %v91, %v266
  %v268 = vpop.f32.mrb[0].mxu0
  %269 = vdwg.mxu0
  %v271 = vsel %vm103, %v49, 0
  %273 = vmatprep.subr.mxu0 0.0
  %274 = vmatpush1.msra.mxu0 %v45
  %275 = vmatprep.subr.mxu0 0.0
  %276 = vmatpush1.msra.mxu0 %v46
  %277 = vmatprep.subr.mxu0 0.0
  %278 = vmatpush1.msra.mxu0 %v47
  %279 = vmatprep.subr.mxu0 0.0
  %280 = vmatpush1.msra.mxu0 %v48
  %281 = vmatprep.subr.mxu0 0.0
  %282 = vmatpush1.msra.mxu0 %v271
  %283 = vmatprep.subr.mxu0 0.0
  %284 = vmatpush1.msra.mxu0 0.0
  %285 = vmatprep.subr.mxu0 0.0
  %286 = vmatpush1.msra.mxu0 0.0
  %287 = vmatprep.subr.mxu0 0.0
  %288 = vmatpush1.msra.mxu0 0.0
  %289 = vmatprep.subr.mxu0 0.0
  %290 = vmatpush1.msra.mxu0 0.0
  %291 = vmatprep.subr.mxu0 0.0
  %292 = vmatpush1.msra.mxu0 0.0
  %293 = vmatprep.subr.mxu0 0.0
  %294 = vmatpush1.msra.mxu0 0.0
  %295 = vmatprep.subr.mxu0 0.0
  %296 = vmatpush1.msra.mxu0 0.0
  %297 = vmatprep.subr.mxu0 0.0
  %298 = vmatpush1.msra.mxu0 0.0
  %299 = vmatprep.subr.mxu0 0.0
  %300 = vmatpush1.msra.mxu0 0.0
  %301 = vmatprep.subr.mxu0 0.0
  %302 = vmatpush1.msra.mxu0 0.0
  %303 = vmatprep.subr.mxu0 0.0
  %304 = vmatpush1.msra.mxu0 0.0
  %305 = vmatprep.subr.mxu0 0.0
  %306 = vmatpush1.msra.mxu0 0.0
  %307 = vmatprep.subr.mxu0 0.0
  %308 = vmatpush1.msra.mxu0 0.0
  %309 = vmatprep.subr.mxu0 0.0
  %310 = vmatpush1.msra.mxu0 0.0
  %311 = vmatprep.subr.mxu0 0.0
  %312 = vmatpush1.msra.mxu0 0.0
  %313 = vmatprep.subr.mxu0 0.0
  %314 = vmatpush1.msra.mxu0 0.0
  %315 = vmatprep.subr.mxu0 0.0
  %316 = vmatpush1.msra.mxu0 0.0
  %317 = vmatprep.subr.mxu0 0.0
  %318 = vmatpush1.msra.mxu0 0.0
  %319 = vmatprep.subr.mxu0 0.0
  %320 = vmatpush1.msra.mxu0 0.0
  %321 = vmatprep.subr.mxu0 0.0
  %322 = vmatpush1.msra.mxu0 0.0
  %323 = vmatprep.subr.mxu0 0.0
  %324 = vmatpush1.msra.mxu0 0.0
  %325 = vmatprep.subr.mxu0 0.0
  %326 = vmatpush1.msra.mxu0 0.0
  %327 = vmatprep.subr.mxu0 0.0
  %328 = vmatpush1.msra.mxu0 0.0
  %329 = vmatprep.subr.mxu0 0.0
  %330 = vmatpush1.msra.mxu0 0.0
  %331 = vmatprep.subr.mxu0 0.0
  %332 = vmatpush1.msra.mxu0 0.0
  %333 = vmatprep.subr.mxu0 0.0
  %334 = vmatpush1.msra.mxu0 0.0
  %335 = vmatprep.subr.mxu0 0.0
  %336 = vmatpush1.msra.mxu0 0.0
  %337 = vmatprep.mubr.f32.mxu0 0.0
  %338 = vmatmul.mubr.f32.gmra.mrb[0].mxu0 %v95
  %v339 = vpop.f32.mrb[0].mxu0
  %v340 = vadd.f32 %v81, %v339
  %v341 = vpop.f32.mrb[0].mxu0
  %342 = vmatprep.mubr.f32.mxu0 0.0
  %343 = vmatmul.mubr.f32.gmra.mrb[0].mxu0 %v98
  %v344 = vpop.f32.mrb[0].mxu0
  %v345 = vadd.f32 %v86, %v344
  %v346 = vpop.f32.mrb[0].mxu0
  %347 = vmatprep.mubr.f32.mxu0 0.0
  %348 = vmatmul.mubr.f32.gmra.mrb[0].mxu0 %v101
  %v349 = vpop.f32.mrb[0].mxu0
  %v350 = vadd.f32 %v91, %v349
  %v351 = vpop.f32.mrb[0].mxu0
  %352 = vdwg.mxu0
  %v354 = vsel %vm103, %v54, 0
  %356 = vmatprep.subr.mxu0 0.0
  %357 = vmatpush1.msra.mxu0 %v50
  %358 = vmatprep.subr.mxu0 0.0
  %359 = vmatpush1.msra.mxu0 %v51
  %360 = vmatprep.subr.mxu0 0.0
  %361 = vmatpush1.msra.mxu0 %v52
  %362 = vmatprep.subr.mxu0 0.0
  %363 = vmatpush1.msra.mxu0 %v53
  %364 = vmatprep.subr.mxu0 0.0
  %365 = vmatpush1.msra.mxu0 %v354
  %366 = vmatprep.subr.mxu0 0.0
  %367 = vmatpush1.msra.mxu0 0.0
  %368 = vmatprep.subr.mxu0 0.0
  %369 = vmatpush1.msra.mxu0 0.0
  %370 = vmatprep.subr.mxu0 0.0
  %371 = vmatpush1.msra.mxu0 0.0
  %372 = vmatprep.subr.mxu0 0.0
  %373 = vmatpush1.msra.mxu0 0.0
  %374 = vmatprep.subr.mxu0 0.0
  %375 = vmatpush1.msra.mxu0 0.0
  %376 = vmatprep.subr.mxu0 0.0
  %377 = vmatpush1.msra.mxu0 0.0
  %378 = vmatprep.subr.mxu0 0.0
  %379 = vmatpush1.msra.mxu0 0.0
  %380 = vmatprep.subr.mxu0 0.0
  %381 = vmatpush1.msra.mxu0 0.0
  %382 = vmatprep.subr.mxu0 0.0
  %383 = vmatpush1.msra.mxu0 0.0
  %384 = vmatprep.subr.mxu0 0.0
  %385 = vmatpush1.msra.mxu0 0.0
  %386 = vmatprep.subr.mxu0 0.0
  %387 = vmatpush1.msra.mxu0 0.0
  %388 = vmatprep.subr.mxu0 0.0
  %389 = vmatpush1.msra.mxu0 0.0
  %390 = vmatprep.subr.mxu0 0.0
  %391 = vmatpush1.msra.mxu0 0.0
  %392 = vmatprep.subr.mxu0 0.0
  %393 = vmatpush1.msra.mxu0 0.0
  %394 = vmatprep.subr.mxu0 0.0
  %395 = vmatpush1.msra.mxu0 0.0
  %396 = vmatprep.subr.mxu0 0.0
  %397 = vmatpush1.msra.mxu0 0.0
  %398 = vmatprep.subr.mxu0 0.0
  %399 = vmatpush1.msra.mxu0 0.0
  %400 = vmatprep.subr.mxu0 0.0
  %401 = vmatpush1.msra.mxu0 0.0
  %402 = vmatprep.subr.mxu0 0.0
  %403 = vmatpush1.msra.mxu0 0.0
  %404 = vmatprep.subr.mxu0 0.0
  %405 = vmatpush1.msra.mxu0 0.0
  %406 = vmatprep.subr.mxu0 0.0
  %407 = vmatpush1.msra.mxu0 0.0
  %408 = vmatprep.subr.mxu0 0.0
  %409 = vmatpush1.msra.mxu0 0.0
  %410 = vmatprep.subr.mxu0 0.0
  %411 = vmatpush1.msra.mxu0 0.0
  %412 = vmatprep.subr.mxu0 0.0
  %413 = vmatpush1.msra.mxu0 0.0
  %414 = vmatprep.subr.mxu0 0.0
  %415 = vmatpush1.msra.mxu0 0.0
  %416 = vmatprep.subr.mxu0 0.0
  %417 = vmatpush1.msra.mxu0 0.0
  %418 = vmatprep.subr.mxu0 0.0
  %419 = vmatpush1.msra.mxu0 0.0
  %420 = vmatprep.mubr.f32.mxu0 0.0
  %421 = vmatmul.mubr.f32.gmra.mrb[0].mxu0 %v95
  %v422 = vpop.f32.mrb[0].mxu0
  %v423 = vadd.f32 %v81, %v422
  %v424 = vpop.f32.mrb[0].mxu0
  %425 = vmatprep.mubr.f32.mxu0 0.0
  %426 = vmatmul.mubr.f32.gmra.mrb[0].mxu0 %v98
  %v427 = vpop.f32.mrb[0].mxu0
  %v428 = vadd.f32 %v86, %v427
  %v429 = vpop.f32.mrb[0].mxu0
  %430 = vmatprep.mubr.f32.mxu0 0.0
  %431 = vmatmul.mubr.f32.gmra.mrb[0].mxu0 %v101
  %v432 = vpop.f32.mrb[0].mxu0
  %v433 = vadd.f32 %v91, %v432
  %v434 = vpop.f32.mrb[0].mxu0
  %435 = vdwg.mxu0
  %v437 = vsel %vm103, %v59, 0
  %439 = vmatprep.subr.mxu0 0.0
  %440 = vmatpush1.msra.mxu0 %v55
  %441 = vmatprep.subr.mxu0 0.0
  %442 = vmatpush1.msra.mxu0 %v56
  %443 = vmatprep.subr.mxu0 0.0
  %444 = vmatpush1.msra.mxu0 %v57
  %445 = vmatprep.subr.mxu0 0.0
  %446 = vmatpush1.msra.mxu0 %v58
  %447 = vmatprep.subr.mxu0 0.0
  %448 = vmatpush1.msra.mxu0 %v437
  %449 = vmatprep.subr.mxu0 0.0
  %450 = vmatpush1.msra.mxu0 0.0
  %451 = vmatprep.subr.mxu0 0.0
  %452 = vmatpush1.msra.mxu0 0.0
  %453 = vmatprep.subr.mxu0 0.0
  %454 = vmatpush1.msra.mxu0 0.0
  %455 = vmatprep.subr.mxu0 0.0
  %456 = vmatpush1.msra.mxu0 0.0
  %457 = vmatprep.subr.mxu0 0.0
  %458 = vmatpush1.msra.mxu0 0.0
  %459 = vmatprep.subr.mxu0 0.0
  %460 = vmatpush1.msra.mxu0 0.0
  %461 = vmatprep.subr.mxu0 0.0
  %462 = vmatpush1.msra.mxu0 0.0
  %463 = vmatprep.subr.mxu0 0.0
  %464 = vmatpush1.msra.mxu0 0.0
  %465 = vmatprep.subr.mxu0 0.0
  %466 = vmatpush1.msra.mxu0 0.0
  %467 = vmatprep.subr.mxu0 0.0
  %468 = vmatpush1.msra.mxu0 0.0
  %469 = vmatprep.subr.mxu0 0.0
  %470 = vmatpush1.msra.mxu0 0.0
  %471 = vmatprep.subr.mxu0 0.0
  %472 = vmatpush1.msra.mxu0 0.0
  %473 = vmatprep.subr.mxu0 0.0
  %474 = vmatpush1.msra.mxu0 0.0
  %475 = vmatprep.subr.mxu0 0.0
  %476 = vmatpush1.msra.mxu0 0.0
  %477 = vmatprep.subr.mxu0 0.0
  %478 = vmatpush1.msra.mxu0 0.0
  %479 = vmatprep.subr.mxu0 0.0
  %480 = vmatpush1.msra.mxu0 0.0
  %481 = vmatprep.subr.mxu0 0.0
  %482 = vmatpush1.msra.mxu0 0.0
  %483 = vmatprep.subr.mxu0 0.0
  %484 = vmatpush1.msra.mxu0 0.0
  %485 = vmatprep.subr.mxu0 0.0
  %486 = vmatpush1.msra.mxu0 0.0
  %487 = vmatprep.subr.mxu0 0.0
  %488 = vmatpush1.msra.mxu0 0.0
  %489 = vmatprep.subr.mxu0 0.0
  %490 = vmatpush1.msra.mxu0 0.0
  %491 = vmatprep.subr.mxu0 0.0
  %492 = vmatpush1.msra.mxu0 0.0
  %493 = vmatprep.subr.mxu0 0.0
  %494 = vmatpush1.msra.mxu0 0.0
  %495 = vmatprep.subr.mxu0 0.0
  %496 = vmatpush1.msra.mxu0 0.0
  %497 = vmatprep.subr.mxu0 0.0
  %498 = vmatpush1.msra.mxu0 0.0
  %499 = vmatprep.subr.mxu0 0.0
  %500 = vmatpush1.msra.mxu0 0.0
  %501 = vmatprep.subr.mxu0 0.0
  %502 = vmatpush1.msra.mxu0 0.0
  %503 = vmatprep.mubr.f32.mxu0 0.0
  %504 = vmatmul.mubr.f32.gmra.mrb[0].mxu0 %v95
  %v505 = vpop.f32.mrb[0].mxu0
  %v506 = vadd.f32 %v81, %v505
  %v507 = vpop.f32.mrb[0].mxu0
  %508 = vmatprep.mubr.f32.mxu0 0.0
  %509 = vmatmul.mubr.f32.gmra.mrb[0].mxu0 %v98
  %v510 = vpop.f32.mrb[0].mxu0
  %v511 = vadd.f32 %v86, %v510
  %v512 = vpop.f32.mrb[0].mxu0
  %513 = vmatprep.mubr.f32.mxu0 0.0
  %514 = vmatmul.mubr.f32.gmra.mrb[0].mxu0 %v101
  %v515 = vpop.f32.mrb[0].mxu0
  %v516 = vadd.f32 %v91, %v515
  %v517 = vpop.f32.mrb[0].mxu0
  %518 = vdwg.mxu0
  %v520 = vsel %vm103, %v64, 0
  %522 = vmatprep.subr.mxu0 0.0
  %523 = vmatpush1.msra.mxu0 %v60
  %524 = vmatprep.subr.mxu0 0.0
  %525 = vmatpush1.msra.mxu0 %v61
  %526 = vmatprep.subr.mxu0 0.0
  %527 = vmatpush1.msra.mxu0 %v62
  %528 = vmatprep.subr.mxu0 0.0
  %529 = vmatpush1.msra.mxu0 %v63
  %530 = vmatprep.subr.mxu0 0.0
  %531 = vmatpush1.msra.mxu0 %v520
  %532 = vmatprep.subr.mxu0 0.0
  %533 = vmatpush1.msra.mxu0 0.0
  %534 = vmatprep.subr.mxu0 0.0
  %535 = vmatpush1.msra.mxu0 0.0
  %536 = vmatprep.subr.mxu0 0.0
  %537 = vmatpush1.msra.mxu0 0.0
  %538 = vmatprep.subr.mxu0 0.0
  %539 = vmatpush1.msra.mxu0 0.0
  %540 = vmatprep.subr.mxu0 0.0
  %541 = vmatpush1.msra.mxu0 0.0
  %542 = vmatprep.subr.mxu0 0.0
  %543 = vmatpush1.msra.mxu0 0.0
  %544 = vmatprep.subr.mxu0 0.0
  %545 = vmatpush1.msra.mxu0 0.0
  %546 = vmatprep.subr.mxu0 0.0
  %547 = vmatpush1.msra.mxu0 0.0
  %548 = vmatprep.subr.mxu0 0.0
  %549 = vmatpush1.msra.mxu0 0.0
  %550 = vmatprep.subr.mxu0 0.0
  %551 = vmatpush1.msra.mxu0 0.0
  %552 = vmatprep.subr.mxu0 0.0
  %553 = vmatpush1.msra.mxu0 0.0
  %554 = vmatprep.subr.mxu0 0.0
  %555 = vmatpush1.msra.mxu0 0.0
  %556 = vmatprep.subr.mxu0 0.0
  %557 = vmatpush1.msra.mxu0 0.0
  %558 = vmatprep.subr.mxu0 0.0
  %559 = vmatpush1.msra.mxu0 0.0
  %560 = vmatprep.subr.mxu0 0.0
  %561 = vmatpush1.msra.mxu0 0.0
  %562 = vmatprep.subr.mxu0 0.0
  %563 = vmatpush1.msra.mxu0 0.0
  %564 = vmatprep.subr.mxu0 0.0
  %565 = vmatpush1.msra.mxu0 0.0
  %566 = vmatprep.subr.mxu0 0.0
  %567 = vmatpush1.msra.mxu0 0.0
  %568 = vmatprep.subr.mxu0 0.0
  %569 = vmatpush1.msra.mxu0 0.0
  %570 = vmatprep.subr.mxu0 0.0
  %571 = vmatpush1.msra.mxu0 0.0
  %572 = vmatprep.subr.mxu0 0.0
  %573 = vmatpush1.msra.mxu0 0.0
  %574 = vmatprep.subr.mxu0 0.0
  %575 = vmatpush1.msra.mxu0 0.0
  %576 = vmatprep.subr.mxu0 0.0
  %577 = vmatpush1.msra.mxu0 0.0
  %578 = vmatprep.subr.mxu0 0.0
  %579 = vmatpush1.msra.mxu0 0.0
  %580 = vmatprep.subr.mxu0 0.0
  %581 = vmatpush1.msra.mxu0 0.0
  %582 = vmatprep.subr.mxu0 0.0
  %583 = vmatpush1.msra.mxu0 0.0
  %584 = vmatprep.subr.mxu0 0.0
  %585 = vmatpush1.msra.mxu0 0.0
  %586 = vmatprep.mubr.f32.mxu0 0.0
  %587 = vmatmul.mubr.f32.gmra.mrb[0].mxu0 %v95
  %v588 = vpop.f32.mrb[0].mxu0
  %v589 = vadd.f32 %v81, %v588
  %v590 = vpop.f32.mrb[0].mxu0
  %591 = vmatprep.mubr.f32.mxu0 0.0
  %592 = vmatmul.mubr.f32.gmra.mrb[0].mxu0 %v98
  %v593 = vpop.f32.mrb[0].mxu0
  %v594 = vadd.f32 %v86, %v593
  %v595 = vpop.f32.mrb[0].mxu0
  %596 = vmatprep.mubr.f32.mxu0 0.0
  %597 = vmatmul.mubr.f32.gmra.mrb[0].mxu0 %v101
  %v598 = vpop.f32.mrb[0].mxu0
  %v599 = vadd.f32 %v91, %v598
  %v600 = vpop.f32.mrb[0].mxu0
  %601 = vdwg.mxu0
  %v603 = vsel %vm103, %v69, 0
  %605 = vmatprep.subr.mxu0 0.0
  %606 = vmatpush1.msra.mxu0 %v65
  %607 = vmatprep.subr.mxu0 0.0
  %608 = vmatpush1.msra.mxu0 %v66
  %609 = vmatprep.subr.mxu0 0.0
  %610 = vmatpush1.msra.mxu0 %v67
  %611 = vmatprep.subr.mxu0 0.0
  %612 = vmatpush1.msra.mxu0 %v68
  %613 = vmatprep.subr.mxu0 0.0
  %614 = vmatpush1.msra.mxu0 %v603
  %615 = vmatprep.subr.mxu0 0.0
  %616 = vmatpush1.msra.mxu0 0.0
  %617 = vmatprep.subr.mxu0 0.0
  %618 = vmatpush1.msra.mxu0 0.0
  %619 = vmatprep.subr.mxu0 0.0
  %620 = vmatpush1.msra.mxu0 0.0
  %621 = vmatprep.subr.mxu0 0.0
  %622 = vmatpush1.msra.mxu0 0.0
  %623 = vmatprep.subr.mxu0 0.0
  %624 = vmatpush1.msra.mxu0 0.0
  %625 = vmatprep.subr.mxu0 0.0
  %626 = vmatpush1.msra.mxu0 0.0
  %627 = vmatprep.subr.mxu0 0.0
  %628 = vmatpush1.msra.mxu0 0.0
  %629 = vmatprep.subr.mxu0 0.0
  %630 = vmatpush1.msra.mxu0 0.0
  %631 = vmatprep.subr.mxu0 0.0
  %632 = vmatpush1.msra.mxu0 0.0
  %633 = vmatprep.subr.mxu0 0.0
  %634 = vmatpush1.msra.mxu0 0.0
  %635 = vmatprep.subr.mxu0 0.0
  %636 = vmatpush1.msra.mxu0 0.0
  %637 = vmatprep.subr.mxu0 0.0
  %638 = vmatpush1.msra.mxu0 0.0
  %639 = vmatprep.subr.mxu0 0.0
  %640 = vmatpush1.msra.mxu0 0.0
  %641 = vmatprep.subr.mxu0 0.0
  %642 = vmatpush1.msra.mxu0 0.0
  %643 = vmatprep.subr.mxu0 0.0
  %644 = vmatpush1.msra.mxu0 0.0
  %645 = vmatprep.subr.mxu0 0.0
  %646 = vmatpush1.msra.mxu0 0.0
  %647 = vmatprep.subr.mxu0 0.0
  %648 = vmatpush1.msra.mxu0 0.0
  %649 = vmatprep.subr.mxu0 0.0
  %650 = vmatpush1.msra.mxu0 0.0
  %651 = vmatprep.subr.mxu0 0.0
  %652 = vmatpush1.msra.mxu0 0.0
  %653 = vmatprep.subr.mxu0 0.0
  %654 = vmatpush1.msra.mxu0 0.0
  %655 = vmatprep.subr.mxu0 0.0
  %656 = vmatpush1.msra.mxu0 0.0
  %657 = vmatprep.subr.mxu0 0.0
  %658 = vmatpush1.msra.mxu0 0.0
  %659 = vmatprep.subr.mxu0 0.0
  %660 = vmatpush1.msra.mxu0 0.0
  %661 = vmatprep.subr.mxu0 0.0
  %662 = vmatpush1.msra.mxu0 0.0
  %663 = vmatprep.subr.mxu0 0.0
  %664 = vmatpush1.msra.mxu0 0.0
  %665 = vmatprep.subr.mxu0 0.0
  %666 = vmatpush1.msra.mxu0 0.0
  %667 = vmatprep.subr.mxu0 0.0
  %668 = vmatpush1.msra.mxu0 0.0
  %669 = vmatprep.mubr.f32.mxu0 0.0
  %670 = vmatmul.mubr.f32.gmra.mrb[0].mxu0 %v95
  %v671 = vpop.f32.mrb[0].mxu0
  %v672 = vadd.f32 %v81, %v671
  %v673 = vpop.f32.mrb[0].mxu0
  %674 = vmatprep.mubr.f32.mxu0 0.0
  %675 = vmatmul.mubr.f32.gmra.mrb[0].mxu0 %v98
  %v676 = vpop.f32.mrb[0].mxu0
  %v677 = vadd.f32 %v86, %v676
  %v678 = vpop.f32.mrb[0].mxu0
  %679 = vmatprep.mubr.f32.mxu0 0.0
  %680 = vmatmul.mubr.f32.gmra.mrb[0].mxu0 %v101
  %v681 = vpop.f32.mrb[0].mxu0
  %v682 = vadd.f32 %v91, %v681
  %v683 = vpop.f32.mrb[0].mxu0
  %684 = vdwg.mxu0
  %v686 = vsel %vm103, %v74, 0
  %688 = vmatprep.subr.mxu0 0.0
  %689 = vmatpush1.msra.mxu0 %v70
  %690 = vmatprep.subr.mxu0 0.0
  %691 = vmatpush1.msra.mxu0 %v71
  %692 = vmatprep.subr.mxu0 0.0
  %693 = vmatpush1.msra.mxu0 %v72
  %694 = vmatprep.subr.mxu0 0.0
  %695 = vmatpush1.msra.mxu0 %v73
  %696 = vmatprep.subr.mxu0 0.0
  %697 = vmatpush1.msra.mxu0 %v686
  %698 = vmatprep.subr.mxu0 0.0
  %699 = vmatpush1.msra.mxu0 0.0
  %700 = vmatprep.subr.mxu0 0.0
  %701 = vmatpush1.msra.mxu0 0.0
  %702 = vmatprep.subr.mxu0 0.0
  %703 = vmatpush1.msra.mxu0 0.0
  %704 = vmatprep.subr.mxu0 0.0
  %705 = vmatpush1.msra.mxu0 0.0
  %706 = vmatprep.subr.mxu0 0.0
  %707 = vmatpush1.msra.mxu0 0.0
  %708 = vmatprep.subr.mxu0 0.0
  %709 = vmatpush1.msra.mxu0 0.0
  %710 = vmatprep.subr.mxu0 0.0
  %711 = vmatpush1.msra.mxu0 0.0
  %712 = vmatprep.subr.mxu0 0.0
  %713 = vmatpush1.msra.mxu0 0.0
  %714 = vmatprep.subr.mxu0 0.0
  %715 = vmatpush1.msra.mxu0 0.0
  %716 = vmatprep.subr.mxu0 0.0
  %717 = vmatpush1.msra.mxu0 0.0
  %718 = vmatprep.subr.mxu0 0.0
  %719 = vmatpush1.msra.mxu0 0.0
  %720 = vmatprep.subr.mxu0 0.0
  %721 = vmatpush1.msra.mxu0 0.0
  %722 = vmatprep.subr.mxu0 0.0
  %723 = vmatpush1.msra.mxu0 0.0
  %724 = vmatprep.subr.mxu0 0.0
  %725 = vmatpush1.msra.mxu0 0.0
  %726 = vmatprep.subr.mxu0 0.0
  %727 = vmatpush1.msra.mxu0 0.0
  %728 = vmatprep.subr.mxu0 0.0
  %729 = vmatpush1.msra.mxu0 0.0
  %730 = vmatprep.subr.mxu0 0.0
  %731 = vmatpush1.msra.mxu0 0.0
  %732 = vmatprep.subr.mxu0 0.0
  %733 = vmatpush1.msra.mxu0 0.0
  %734 = vmatprep.subr.mxu0 0.0
  %735 = vmatpush1.msra.mxu0 0.0
  %736 = vmatprep.subr.mxu0 0.0
  %737 = vmatpush1.msra.mxu0 0.0
  %738 = vmatprep.subr.mxu0 0.0
  %739 = vmatpush1.msra.mxu0 0.0
  %740 = vmatprep.subr.mxu0 0.0
  %741 = vmatpush1.msra.mxu0 0.0
  %742 = vmatprep.subr.mxu0 0.0
  %743 = vmatpush1.msra.mxu0 0.0
  %744 = vmatprep.subr.mxu0 0.0
  %745 = vmatpush1.msra.mxu0 0.0
  %746 = vmatprep.subr.mxu0 0.0
  %747 = vmatpush1.msra.mxu0 0.0
  %748 = vmatprep.subr.mxu0 0.0
  %749 = vmatpush1.msra.mxu0 0.0
  %750 = vmatprep.subr.mxu0 0.0
  %751 = vmatpush1.msra.mxu0 0.0
  %752 = vmatprep.mubr.f32.mxu0 0.0
  %753 = vmatmul.mubr.f32.gmra.mrb[0].mxu0 %v95
  %v754 = vpop.f32.mrb[0].mxu0
  %v755 = vadd.f32 %v81, %v754
  %v756 = vpop.f32.mrb[0].mxu0
  %757 = vmatprep.mubr.f32.mxu0 0.0
  %758 = vmatmul.mubr.f32.gmra.mrb[0].mxu0 %v98
  %v759 = vpop.f32.mrb[0].mxu0
  %v760 = vadd.f32 %v86, %v759
  %v761 = vpop.f32.mrb[0].mxu0
  %762 = vmatprep.mubr.f32.mxu0 0.0
  %763 = vmatmul.mubr.f32.gmra.mrb[0].mxu0 %v101
  %v764 = vpop.f32.mrb[0].mxu0
  %v765 = vadd.f32 %v91, %v764
  %v766 = vpop.f32.mrb[0].mxu0
  %767 = vdwg.mxu0
  %v768 = vld [vmem:[%s3] sm:$0xff]
  %v769 = vld [vmem:[%s3 + $0x8] sm:$0xff]
  %v770 = vld [vmem:[%s3 + $0x10] sm:$0xff]
  %v771 = vld [vmem:[%s4] sm:$0xff]
  %v772 = vld [vmem:[%s4 + $0x8] sm:$0xff]
  %v773 = vld [vmem:[%s4 + $0x10] sm:$0xff]
  %775 = vset.pattern.permute.xlu0 0
  %776 = vperm.xlu0 %775, %v771
  %v777 = vpop.permute.xlu0 %776
  %780 = vset.pattern.permute.xlu0 0
  %781 = vperm.xlu0 %780, %v772
  %v782 = vpop.permute.xlu0 %781
  %785 = vset.pattern.permute.xlu0 0
  %786 = vperm.xlu0 %785, %v773
  %v787 = vpop.permute.xlu0 %786
  %vm789 = vcmask 64512
  %v791 = vsel %vm789, %v768, 0
  %v794 = vsel %vm789, %v769, 0
  %v797 = vsel %vm789, %v770, 0
  %799 = vmatprep.subr.mxu0 0.0
  %800 = vmatpush1.msra.mxu0 0.0
  %801 = vmatprep.subr.mxu0 0.0
  %802 = vmatpush1.msra.mxu0 0.0
  %803 = vmatprep.subr.mxu0 0.0
  %804 = vmatpush1.msra.mxu0 0.0
  %805 = vmatprep.subr.mxu0 0.0
  %806 = vmatpush1.msra.mxu0 0.0
  %807 = vmatprep.subr.mxu0 0.0
  %808 = vmatpush1.msra.mxu0 0.0
  %809 = vmatprep.subr.mxu0 0.0
  %810 = vmatpush1.msra.mxu0 0.0
  %811 = vmatprep.subr.mxu0 0.0
  %812 = vmatpush1.msra.mxu0 0.0
  %813 = vmatprep.subr.mxu0 0.0
  %814 = vmatpush1.msra.mxu0 0.0
  %815 = vmatprep.subr.mxu0 0.0
  %816 = vmatpush1.msra.mxu0 0.0
  %817 = vmatprep.subr.mxu0 0.0
  %818 = vmatpush1.msra.mxu0 0.0
  %819 = vmatprep.subr.mxu0 0.0
  %820 = vmatpush1.msra.mxu0 0.0
  %821 = vmatprep.subr.mxu0 0.0
  %822 = vmatpush1.msra.mxu0 0.0
  %823 = vmatprep.subr.mxu0 0.0
  %824 = vmatpush1.msra.mxu0 0.0
  %825 = vmatprep.subr.mxu0 0.0
  %826 = vmatpush1.msra.mxu0 0.0
  %827 = vmatprep.subr.mxu0 0.0
  %828 = vmatpush1.msra.mxu0 0.0
  %829 = vmatprep.subr.mxu0 0.0
  %830 = vmatpush1.msra.mxu0 0.0
  %831 = vmatprep.subr.mxu0 0.0
  %832 = vmatpush1.msra.mxu0 0.0
  %833 = vmatprep.subr.mxu0 0.0
  %834 = vmatpush1.msra.mxu0 0.0
  %835 = vmatprep.subr.mxu0 0.0
  %836 = vmatpush1.msra.mxu0 0.0
  %837 = vmatprep.subr.mxu0 0.0
  %838 = vmatpush1.msra.mxu0 0.0
  %839 = vmatprep.subr.mxu0 0.0
  %840 = vmatpush1.msra.mxu0 0.0
  %841 = vmatprep.subr.mxu0 0.0
  %842 = vmatpush1.msra.mxu0 0.0
  %843 = vmatprep.subr.mxu0 0.0
  %844 = vmatpush1.msra.mxu0 0.0
  %845 = vmatprep.subr.mxu0 0.0
  %846 = vmatpush1.msra.mxu0 0.0
  %847 = vmatprep.subr.mxu0 0.0
  %848 = vmatpush1.msra.mxu0 0.0
  %849 = vmatprep.subr.mxu0 0.0
  %850 = vmatpush1.msra.mxu0 0.0
  %851 = vmatprep.subr.mxu0 0.0
  %852 = vmatpush1.msra.mxu0 0.0
  %853 = vmatprep.subr.mxu0 0.0
  %854 = vmatpush1.msra.mxu0 0.0
  %855 = vmatprep.subr.mxu0 0.0
  %856 = vmatpush1.msra.mxu0 0.0
  %857 = vmatprep.subr.mxu0 0.0
  %858 = vmatpush1.msra.mxu0 0.0
  %859 = vmatprep.subr.mxu0 0.0
  %860 = vmatpush1.msra.mxu0 0.0
  %861 = vmatprep.subr.mxu0 0.0
  %862 = vmatpush1.msra.mxu0 0.0
  %863 = vmatprep.mubr.f32.mxu0 0.0
  %864 = vmatmul.mubr.f32.gmra.mrb[0].mxu0 %v791
  %v865 = vpop.f32.mrb[0].mxu0
  %v866 = vadd.f32 %v777, %v865
  %v867 = vpop.f32.mrb[0].mxu0
  %868 = vmatprep.mubr.f32.mxu0 0.0
  %869 = vmatmul.mubr.f32.gmra.mrb[0].mxu0 %v794
  %v870 = vpop.f32.mrb[0].mxu0
  %v871 = vadd.f32 %v782, %v870
  %v872 = vpop.f32.mrb[0].mxu0
  %873 = vmatprep.mubr.f32.mxu0 0.0
  %874 = vmatmul.mubr.f32.gmra.mrb[0].mxu0 %v797
  %v875 = vpop.f32.mrb[0].mxu0
  %v876 = vadd.f32 %v787, %v875
  %v877 = vpop.f32.mrb[0].mxu0
  %878 = vdwg.mxu0
  %v879 = vadd.f32 %v174, %v866
  %v880 = vxor.u32 %v879, 2147483648
  %v881 = vmul.f32 %v880, 1.442695
  %v882 = vpow.pop %v881
  %v883 = vadd.f32 %v882, 1.0
  %v884 = vrcp.pop %v883
  %v885 = vmul.f32 1.0, %v884
  %v886 = vadd.f32 %v179, %v871
  %v887 = vxor.u32 %v886, 2147483648
  %v888 = vmul.f32 %v887, 1.442695
  %v889 = vpow.pop %v888
  %v890 = vadd.f32 %v889, 1.0
  %v891 = vrcp.pop %v890
  %v892 = vmul.f32 1.0, %v891
  %v893 = vmul.f32 %v885, %v876
  %v894 = vadd.f32 %v184, %v893
  %v895 = vtanh.pop %v894
  %v896 = vsub.f32 1.0, %v892
  %v897 = vmul.f32 %v896, %v895
  %v898 = vmul.f32 %v892, 0.0
  %v899 = vadd.f32 %v897, %v898
  %900 = vmatprep.subr.mxu0 0.0
  %901 = vmatpush1.msra.mxu0 %v899
  %902 = vmatprep.subr.mxu0 0.0
  %903 = vmatpush1.msra.mxu0 0.0
  %904 = vmatprep.subr.mxu0 0.0
  %905 = vmatpush1.msra.mxu0 0.0
  %906 = vmatprep.subr.mxu0 0.0
  %907 = vmatpush1.msra.mxu0 0.0
  %908 = vmatprep.subr.mxu0 0.0
  %909 = vmatpush1.msra.mxu0 0.0
  %910 = vmatprep.subr.mxu0 0.0
  %911 = vmatpush1.msra.mxu0 0.0
  %912 = vmatprep.subr.mxu0 0.0
  %913 = vmatpush1.msra.mxu0 0.0
  %914 = vmatprep.subr.mxu0 0.0
  %915 = vmatpush1.msra.mxu0 0.0
  %916 = vmatprep.subr.mxu0 0.0
  %917 = vmatpush1.msra.mxu0 0.0
  %918 = vmatprep.subr.mxu0 0.0
  %919 = vmatpush1.msra.mxu0 0.0
  %920 = vmatprep.subr.mxu0 0.0
  %921 = vmatpush1.msra.mxu0 0.0
  %922 = vmatprep.subr.mxu0 0.0
  %923 = vmatpush1.msra.mxu0 0.0
  %924 = vmatprep.subr.mxu0 0.0
  %925 = vmatpush1.msra.mxu0 0.0
  %926 = vmatprep.subr.mxu0 0.0
  %927 = vmatpush1.msra.mxu0 0.0
  %928 = vmatprep.subr.mxu0 0.0
  %929 = vmatpush1.msra.mxu0 0.0
  %930 = vmatprep.subr.mxu0 0.0
  %931 = vmatpush1.msra.mxu0 0.0
  %932 = vmatprep.subr.mxu0 0.0
  %933 = vmatpush1.msra.mxu0 0.0
  %934 = vmatprep.subr.mxu0 0.0
  %935 = vmatpush1.msra.mxu0 0.0
  %936 = vmatprep.subr.mxu0 0.0
  %937 = vmatpush1.msra.mxu0 0.0
  %938 = vmatprep.subr.mxu0 0.0
  %939 = vmatpush1.msra.mxu0 0.0
  %940 = vmatprep.subr.mxu0 0.0
  %941 = vmatpush1.msra.mxu0 0.0
  %942 = vmatprep.subr.mxu0 0.0
  %943 = vmatpush1.msra.mxu0 0.0
  %944 = vmatprep.subr.mxu0 0.0
  %945 = vmatpush1.msra.mxu0 0.0
  %946 = vmatprep.subr.mxu0 0.0
  %947 = vmatpush1.msra.mxu0 0.0
  %948 = vmatprep.subr.mxu0 0.0
  %949 = vmatpush1.msra.mxu0 0.0
  %950 = vmatprep.subr.mxu0 0.0
  %951 = vmatpush1.msra.mxu0 0.0
  %952 = vmatprep.subr.mxu0 0.0
  %953 = vmatpush1.msra.mxu0 0.0
  %954 = vmatprep.subr.mxu0 0.0
  %955 = vmatpush1.msra.mxu0 0.0
  %956 = vmatprep.subr.mxu0 0.0
  %957 = vmatpush1.msra.mxu0 0.0
  %958 = vmatprep.subr.mxu0 0.0
  %959 = vmatpush1.msra.mxu0 0.0
  %960 = vmatprep.subr.mxu0 0.0
  %961 = vmatpush1.msra.mxu0 0.0
  %962 = vmatprep.subr.mxu0 0.0
  %963 = vmatpush1.msra.mxu0 0.0
  %964 = vmatprep.mubr.f32.mxu0 0.0
  %965 = vmatmul.mubr.f32.gmra.mrb[0].mxu0 %v791
  %v966 = vpop.f32.mrb[0].mxu0
  %v967 = vadd.f32 %v777, %v966
  %v968 = vpop.f32.mrb[0].mxu0
  %969 = vmatprep.mubr.f32.mxu0 0.0
  %970 = vmatmul.mubr.f32.gmra.mrb[0].mxu0 %v794
  %v971 = vpop.f32.mrb[0].mxu0
  %v972 = vadd.f32 %v782, %v971
  %v973 = vpop.f32.mrb[0].mxu0
  %974 = vmatprep.mubr.f32.mxu0 0.0
  %975 = vmatmul.mubr.f32.gmra.mrb[0].mxu0 %v797
  %v976 = vpop.f32.mrb[0].mxu0
  %v977 = vadd.f32 %v787, %v976
  %v978 = vpop.f32.mrb[0].mxu0
  %979 = vdwg.mxu0
  %v980 = vadd.f32 %v257, %v967
  %v981 = vxor.u32 %v980, 2147483648
  %v982 = vmul.f32 %v981, 1.442695
  %v983 = vpow.pop %v982
  %v984 = vadd.f32 %v983, 1.0
  %v985 = vrcp.pop %v984
  %v986 = vmul.f32 1.0, %v985
  %v987 = vadd.f32 %v262, %v972
  %v988 = vxor.u32 %v987, 2147483648
  %v989 = vmul.f32 %v988, 1.442695
  %v990 = vpow.pop %v989
  %v991 = vadd.f32 %v990, 1.0
  %v992 = vrcp.pop %v991
  %v993 = vmul.f32 1.0, %v992
  %v994 = vmul.f32 %v986, %v977
  %v995 = vadd.f32 %v267, %v994
  %v996 = vtanh.pop %v995
  %v997 = vsub.f32 1.0, %v993
  %v998 = vmul.f32 %v997, %v996
  %v999 = vmul.f32 %v993, %v899
  %v1000 = vadd.f32 %v998, %v999
  %1001 = vmatprep.subr.mxu0 0.0
  %1002 = vmatpush1.msra.mxu0 %v1000
  %1003 = vmatprep.subr.mxu0 0.0
  %1004 = vmatpush1.msra.mxu0 0.0
  %1005 = vmatprep.subr.mxu0 0.0
  %1006 = vmatpush1.msra.mxu0 0.0
  %1007 = vmatprep.subr.mxu0 0.0
  %1008 = vmatpush1.msra.mxu0 0.0
  %1009 = vmatprep.subr.mxu0 0.0
  %1010 = vmatpush1.msra.mxu0 0.0
  %1011 = vmatprep.subr.mxu0 0.0
  %1012 = vmatpush1.msra.mxu0 0.0
  %1013 = vmatprep.subr.mxu0 0.0
  %1014 = vmatpush1.msra.mxu0 0.0
  %1015 = vmatprep.subr.mxu0 0.0
  %1016 = vmatpush1.msra.mxu0 0.0
  %1017 = vmatprep.subr.mxu0 0.0
  %1018 = vmatpush1.msra.mxu0 0.0
  %1019 = vmatprep.subr.mxu0 0.0
  %1020 = vmatpush1.msra.mxu0 0.0
  %1021 = vmatprep.subr.mxu0 0.0
  %1022 = vmatpush1.msra.mxu0 0.0
  %1023 = vmatprep.subr.mxu0 0.0
  %1024 = vmatpush1.msra.mxu0 0.0
  %1025 = vmatprep.subr.mxu0 0.0
  %1026 = vmatpush1.msra.mxu0 0.0
  %1027 = vmatprep.subr.mxu0 0.0
  %1028 = vmatpush1.msra.mxu0 0.0
  %1029 = vmatprep.subr.mxu0 0.0
  %1030 = vmatpush1.msra.mxu0 0.0
  %1031 = vmatprep.subr.mxu0 0.0
  %1032 = vmatpush1.msra.mxu0 0.0
  %1033 = vmatprep.subr.mxu0 0.0
  %1034 = vmatpush1.msra.mxu0 0.0
  %1035 = vmatprep.subr.mxu0 0.0
  %1036 = vmatpush1.msra.mxu0 0.0
  %1037 = vmatprep.subr.mxu0 0.0
  %1038 = vmatpush1.msra.mxu0 0.0
  %1039 = vmatprep.subr.mxu0 0.0
  %1040 = vmatpush1.msra.mxu0 0.0
  %1041 = vmatprep.subr.mxu0 0.0
  %1042 = vmatpush1.msra.mxu0 0.0
  %1043 = vmatprep.subr.mxu0 0.0
  %1044 = vmatpush1.msra.mxu0 0.0
  %1045 = vmatprep.subr.mxu0 0.0
  %1046 = vmatpush1.msra.mxu0 0.0
  %1047 = vmatprep.subr.mxu0 0.0
  %1048 = vmatpush1.msra.mxu0 0.0
  %1049 = vmatprep.subr.mxu0 0.0
  %1050 = vmatpush1.msra.mxu0 0.0
  %1051 = vmatprep.subr.mxu0 0.0
  %1052 = vmatpush1.msra.mxu0 0.0
  %1053 = vmatprep.subr.mxu0 0.0
  %1054 = vmatpush1.msra.mxu0 0.0
  %1055 = vmatprep.subr.mxu0 0.0
  %1056 = vmatpush1.msra.mxu0 0.0
  %1057 = vmatprep.subr.mxu0 0.0
  %1058 = vmatpush1.msra.mxu0 0.0
  %1059 = vmatprep.subr.mxu0 0.0
  %1060 = vmatpush1.msra.mxu0 0.0
  %1061 = vmatprep.subr.mxu0 0.0
  %1062 = vmatpush1.msra.mxu0 0.0
  %1063 = vmatprep.subr.mxu0 0.0
  %1064 = vmatpush1.msra.mxu0 0.0
  %1065 = vmatprep.mubr.f32.mxu0 0.0
  %1066 = vmatmul.mubr.f32.gmra.mrb[0].mxu0 %v791
  %v1067 = vpop.f32.mrb[0].mxu0
  %v1068 = vadd.f32 %v777, %v1067
  %v1069 = vpop.f32.mrb[0].mxu0
  %1070 = vmatprep.mubr.f32.mxu0 0.0
  %1071 = vmatmul.mubr.f32.gmra.mrb[0].mxu0 %v794
  %v1072 = vpop.f32.mrb[0].mxu0
  %v1073 = vadd.f32 %v782, %v1072
  %v1074 = vpop.f32.mrb[0].mxu0
  %1075 = vmatprep.mubr.f32.mxu0 0.0
  %1076 = vmatmul.mubr.f32.gmra.mrb[0].mxu0 %v797
  %v1077 = vpop.f32.mrb[0].mxu0
  %v1078 = vadd.f32 %v787, %v1077
  %v1079 = vpop.f32.mrb[0].mxu0
  %1080 = vdwg.mxu0
  %v1081 = vadd.f32 %v340, %v1068
  %v1082 = vxor.u32 %v1081, 2147483648
  %v1083 = vmul.f32 %v1082, 1.442695
  %v1084 = vpow.pop %v1083
  %v1085 = vadd.f32 %v1084, 1.0
  %v1086 = vrcp.pop %v1085
  %v1087 = vmul.f32 1.0, %v1086
  %v1088 = vadd.f32 %v345, %v1073
  %v1089 = vxor.u32 %v1088, 2147483648
  %v1090 = vmul.f32 %v1089, 1.442695
  %v1091 = vpow.pop %v1090
  %v1092 = vadd.f32 %v1091, 1.0
  %v1093 = vrcp.pop %v1092
  %v1094 = vmul.f32 1.0, %v1093
  %v1095 = vmul.f32 %v1087, %v1078
  %v1096 = vadd.f32 %v350, %v1095
  %v1097 = vtanh.pop %v1096
  %v1098 = vsub.f32 1.0, %v1094
  %v1099 = vmul.f32 %v1098, %v1097
  %v1100 = vmul.f32 %v1094, %v1000
  %v1101 = vadd.f32 %v1099, %v1100
  %1102 = vmatprep.subr.mxu0 0.0
  %1103 = vmatpush1.msra.mxu0 %v1101
  %1104 = vmatprep.subr.mxu0 0.0
  %1105 = vmatpush1.msra.mxu0 0.0
  %1106 = vmatprep.subr.mxu0 0.0
  %1107 = vmatpush1.msra.mxu0 0.0
  %1108 = vmatprep.subr.mxu0 0.0
  %1109 = vmatpush1.msra.mxu0 0.0
  %1110 = vmatprep.subr.mxu0 0.0
  %1111 = vmatpush1.msra.mxu0 0.0
  %1112 = vmatprep.subr.mxu0 0.0
  %1113 = vmatpush1.msra.mxu0 0.0
  %1114 = vmatprep.subr.mxu0 0.0
  %1115 = vmatpush1.msra.mxu0 0.0
  %1116 = vmatprep.subr.mxu0 0.0
  %1117 = vmatpush1.msra.mxu0 0.0
  %1118 = vmatprep.subr.mxu0 0.0
  %1119 = vmatpush1.msra.mxu0 0.0
  %1120 = vmatprep.subr.mxu0 0.0
  %1121 = vmatpush1.msra.mxu0 0.0
  %1122 = vmatprep.subr.mxu0 0.0
  %1123 = vmatpush1.msra.mxu0 0.0
  %1124 = vmatprep.subr.mxu0 0.0
  %1125 = vmatpush1.msra.mxu0 0.0
  %1126 = vmatprep.subr.mxu0 0.0
  %1127 = vmatpush1.msra.mxu0 0.0
  %1128 = vmatprep.subr.mxu0 0.0
  %1129 = vmatpush1.msra.mxu0 0.0
  %1130 = vmatprep.subr.mxu0 0.0
  %1131 = vmatpush1.msra.mxu0 0.0
  %1132 = vmatprep.subr.mxu0 0.0
  %1133 = vmatpush1.msra.mxu0 0.0
  %1134 = vmatprep.subr.mxu0 0.0
  %1135 = vmatpush1.msra.mxu0 0.0
  %1136 = vmatprep.subr.mxu0 0.0
  %1137 = vmatpush1.msra.mxu0 0.0
  %1138 = vmatprep.subr.mxu0 0.0
  %1139 = vmatpush1.msra.mxu0 0.0
  %1140 = vmatprep.subr.mxu0 0.0
  %1141 = vmatpush1.msra.mxu0 0.0
  %1142 = vmatprep.subr.mxu0 0.0
  %1143 = vmatpush1.msra.mxu0 0.0
  %1144 = vmatprep.subr.mxu0 0.0
  %1145 = vmatpush1.msra.mxu0 0.0
  %1146 = vmatprep.subr.mxu0 0.0
  %1147 = vmatpush1.msra.mxu0 0.0
  %1148 = vmatprep.subr.mxu0 0.0
  %1149 = vmatpush1.msra.mxu0 0.0
  %1150 = vmatprep.subr.mxu0 0.0
  %1151 = vmatpush1.msra.mxu0 0.0
  %1152 = vmatprep.subr.mxu0 0.0
  %1153 = vmatpush1.msra.mxu0 0.0
  %1154 = vmatprep.subr.mxu0 0.0
  %1155 = vmatpush1.msra.mxu0 0.0
  %1156 = vmatprep.subr.mxu0 0.0
  %1157 = vmatpush1.msra.mxu0 0.0
  %1158 = vmatprep.subr.mxu0 0.0
  %1159 = vmatpush1.msra.mxu0 0.0
  %1160 = vmatprep.subr.mxu0 0.0
  %1161 = vmatpush1.msra.mxu0 0.0
  %1162 = vmatprep.subr.mxu0 0.0
  %1163 = vmatpush1.msra.mxu0 0.0
  %1164 = vmatprep.subr.mxu0 0.0
  %1165 = vmatpush1.msra.mxu0 0.0
  %1166 = vmatprep.mubr.f32.mxu0 0.0
  %1167 = vmatmul.mubr.f32.gmra.mrb[0].mxu0 %v791
  %v1168 = vpop.f32.mrb[0].mxu0
  %v1169 = vadd.f32 %v777, %v1168
  %v1170 = vpop.f32.mrb[0].mxu0
  %1171 = vmatprep.mubr.f32.mxu0 0.0
  %1172 = vmatmul.mubr.f32.gmra.mrb[0].mxu0 %v794
  %v1173 = vpop.f32.mrb[0].mxu0
  %v1174 = vadd.f32 %v782, %v1173
  %v1175 = vpop.f32.mrb[0].mxu0
  %1176 = vmatprep.mubr.f32.mxu0 0.0
  %1177 = vmatmul.mubr.f32.gmra.mrb[0].mxu0 %v797
  %v1178 = vpop.f32.mrb[0].mxu0
  %v1179 = vadd.f32 %v787, %v1178
  %v1180 = vpop.f32.mrb[0].mxu0
  %1181 = vdwg.mxu0
  %v1182 = vadd.f32 %v423, %v1169
  %v1183 = vxor.u32 %v1182, 2147483648
  %v1184 = vmul.f32 %v1183, 1.442695
  %v1185 = vpow.pop %v1184
  %v1186 = vadd.f32 %v1185, 1.0
  %v1187 = vrcp.pop %v1186
  %v1188 = vmul.f32 1.0, %v1187
  %v1189 = vadd.f32 %v428, %v1174
  %v1190 = vxor.u32 %v1189, 2147483648
  %v1191 = vmul.f32 %v1190, 1.442695
  %v1192 = vpow.pop %v1191
  %v1193 = vadd.f32 %v1192, 1.0
  %v1194 = vrcp.pop %v1193
  %v1195 = vmul.f32 1.0, %v1194
  %v1196 = vmul.f32 %v1188, %v1179
  %v1197 = vadd.f32 %v433, %v1196
  %v1198 = vtanh.pop %v1197
  %v1199 = vsub.f32 1.0, %v1195
  %v1200 = vmul.f32 %v1199, %v1198
  %v1201 = vmul.f32 %v1195, %v1101
  %v1202 = vadd.f32 %v1200, %v1201
  %1203 = vmatprep.subr.mxu0 0.0
  %1204 = vmatpush1.msra.mxu0 %v1202
  %1205 = vmatprep.subr.mxu0 0.0
  %1206 = vmatpush1.msra.mxu0 0.0
  %1207 = vmatprep.subr.mxu0 0.0
  %1208 = vmatpush1.msra.mxu0 0.0
  %1209 = vmatprep.subr.mxu0 0.0
  %1210 = vmatpush1.msra.mxu0 0.0
  %1211 = vmatprep.subr.mxu0 0.0
  %1212 = vmatpush1.msra.mxu0 0.0
  %1213 = vmatprep.subr.mxu0 0.0
  %1214 = vmatpush1.msra.mxu0 0.0
  %1215 = vmatprep.subr.mxu0 0.0
  %1216 = vmatpush1.msra.mxu0 0.0
  %1217 = vmatprep.subr.mxu0 0.0
  %1218 = vmatpush1.msra.mxu0 0.0
  %1219 = vmatprep.subr.mxu0 0.0
  %1220 = vmatpush1.msra.mxu0 0.0
  %1221 = vmatprep.subr.mxu0 0.0
  %1222 = vmatpush1.msra.mxu0 0.0
  %1223 = vmatprep.subr.mxu0 0.0
  %1224 = vmatpush1.msra.mxu0 0.0
  %1225 = vmatprep.subr.mxu0 0.0
  %1226 = vmatpush1.msra.mxu0 0.0
  %1227 = vmatprep.subr.mxu0 0.0
  %1228 = vmatpush1.msra.mxu0 0.0
  %1229 = vmatprep.subr.mxu0 0.0
  %1230 = vmatpush1.msra.mxu0 0.0
  %1231 = vmatprep.subr.mxu0 0.0
  %1232 = vmatpush1.msra.mxu0 0.0
  %1233 = vmatprep.subr.mxu0 0.0
  %1234 = vmatpush1.msra.mxu0 0.0
  %1235 = vmatprep.subr.mxu0 0.0
  %1236 = vmatpush1.msra.mxu0 0.0
  %1237 = vmatprep.subr.mxu0 0.0
  %1238 = vmatpush1.msra.mxu0 0.0
  %1239 = vmatprep.subr.mxu0 0.0
  %1240 = vmatpush1.msra.mxu0 0.0
  %1241 = vmatprep.subr.mxu0 0.0
  %1242 = vmatpush1.msra.mxu0 0.0
  %1243 = vmatprep.subr.mxu0 0.0
  %1244 = vmatpush1.msra.mxu0 0.0
  %1245 = vmatprep.subr.mxu0 0.0
  %1246 = vmatpush1.msra.mxu0 0.0
  %1247 = vmatprep.subr.mxu0 0.0
  %1248 = vmatpush1.msra.mxu0 0.0
  %1249 = vmatprep.subr.mxu0 0.0
  %1250 = vmatpush1.msra.mxu0 0.0
  %1251 = vmatprep.subr.mxu0 0.0
  %1252 = vmatpush1.msra.mxu0 0.0
  %1253 = vmatprep.subr.mxu0 0.0
  %1254 = vmatpush1.msra.mxu0 0.0
  %1255 = vmatprep.subr.mxu0 0.0
  %1256 = vmatpush1.msra.mxu0 0.0
  %1257 = vmatprep.subr.mxu0 0.0
  %1258 = vmatpush1.msra.mxu0 0.0
  %1259 = vmatprep.subr.mxu0 0.0
  %1260 = vmatpush1.msra.mxu0 0.0
  %1261 = vmatprep.subr.mxu0 0.0
  %1262 = vmatpush1.msra.mxu0 0.0
  %1263 = vmatprep.subr.mxu0 0.0
  %1264 = vmatpush1.msra.mxu0 0.0
  %1265 = vmatprep.subr.mxu0 0.0
  %1266 = vmatpush1.msra.mxu0 0.0
  %1267 = vmatprep.mubr.f32.mxu0 0.0
  %1268 = vmatmul.mubr.f32.gmra.mrb[0].mxu0 %v791
  %v1269 = vpop.f32.mrb[0].mxu0
  %v1270 = vadd.f32 %v777, %v1269
  %v1271 = vpop.f32.mrb[0].mxu0
  %1272 = vmatprep.mubr.f32.mxu0 0.0
  %1273 = vmatmul.mubr.f32.gmra.mrb[0].mxu0 %v794
  %v1274 = vpop.f32.mrb[0].mxu0
  %v1275 = vadd.f32 %v782, %v1274
  %v1276 = vpop.f32.mrb[0].mxu0
  %1277 = vmatprep.mubr.f32.mxu0 0.0
  %1278 = vmatmul.mubr.f32.gmra.mrb[0].mxu0 %v797
  %v1279 = vpop.f32.mrb[0].mxu0
  %v1280 = vadd.f32 %v787, %v1279
  %v1281 = vpop.f32.mrb[0].mxu0
  %1282 = vdwg.mxu0
  %v1283 = vadd.f32 %v506, %v1270
  %v1284 = vxor.u32 %v1283, 2147483648
  %v1285 = vmul.f32 %v1284, 1.442695
  %v1286 = vpow.pop %v1285
  %v1287 = vadd.f32 %v1286, 1.0
  %v1288 = vrcp.pop %v1287
  %v1289 = vmul.f32 1.0, %v1288
  %v1290 = vadd.f32 %v511, %v1275
  %v1291 = vxor.u32 %v1290, 2147483648
  %v1292 = vmul.f32 %v1291, 1.442695
  %v1293 = vpow.pop %v1292
  %v1294 = vadd.f32 %v1293, 1.0
  %v1295 = vrcp.pop %v1294
  %v1296 = vmul.f32 1.0, %v1295
  %v1297 = vmul.f32 %v1289, %v1280
  %v1298 = vadd.f32 %v516, %v1297
  %v1299 = vtanh.pop %v1298
  %v1300 = vsub.f32 1.0, %v1296
  %v1301 = vmul.f32 %v1300, %v1299
  %v1302 = vmul.f32 %v1296, %v1202
  %v1303 = vadd.f32 %v1301, %v1302
  %1304 = vmatprep.subr.mxu0 0.0
  %1305 = vmatpush1.msra.mxu0 %v1303
  %1306 = vmatprep.subr.mxu0 0.0
  %1307 = vmatpush1.msra.mxu0 0.0
  %1308 = vmatprep.subr.mxu0 0.0
  %1309 = vmatpush1.msra.mxu0 0.0
  %1310 = vmatprep.subr.mxu0 0.0
  %1311 = vmatpush1.msra.mxu0 0.0
  %1312 = vmatprep.subr.mxu0 0.0
  %1313 = vmatpush1.msra.mxu0 0.0
  %1314 = vmatprep.subr.mxu0 0.0
  %1315 = vmatpush1.msra.mxu0 0.0
  %1316 = vmatprep.subr.mxu0 0.0
  %1317 = vmatpush1.msra.mxu0 0.0
  %1318 = vmatprep.subr.mxu0 0.0
  %1319 = vmatpush1.msra.mxu0 0.0
  %1320 = vmatprep.subr.mxu0 0.0
  %1321 = vmatpush1.msra.mxu0 0.0
  %1322 = vmatprep.subr.mxu0 0.0
  %1323 = vmatpush1.msra.mxu0 0.0
  %1324 = vmatprep.subr.mxu0 0.0
  %1325 = vmatpush1.msra.mxu0 0.0
  %1326 = vmatprep.subr.mxu0 0.0
  %1327 = vmatpush1.msra.mxu0 0.0
  %1328 = vmatprep.subr.mxu0 0.0
  %1329 = vmatpush1.msra.mxu0 0.0
  %1330 = vmatprep.subr.mxu0 0.0
  %1331 = vmatpush1.msra.mxu0 0.0
  %1332 = vmatprep.subr.mxu0 0.0
  %1333 = vmatpush1.msra.mxu0 0.0
  %1334 = vmatprep.subr.mxu0 0.0
  %1335 = vmatpush1.msra.mxu0 0.0
  %1336 = vmatprep.subr.mxu0 0.0
  %1337 = vmatpush1.msra.mxu0 0.0
  %1338 = vmatprep.subr.mxu0 0.0
  %1339 = vmatpush1.msra.mxu0 0.0
  %1340 = vmatprep.subr.mxu0 0.0
  %1341 = vmatpush1.msra.mxu0 0.0
  %1342 = vmatprep.subr.mxu0 0.0
  %1343 = vmatpush1.msra.mxu0 0.0
  %1344 = vmatprep.subr.mxu0 0.0
  %1345 = vmatpush1.msra.mxu0 0.0
  %1346 = vmatprep.subr.mxu0 0.0
  %1347 = vmatpush1.msra.mxu0 0.0
  %1348 = vmatprep.subr.mxu0 0.0
  %1349 = vmatpush1.msra.mxu0 0.0
  %1350 = vmatprep.subr.mxu0 0.0
  %1351 = vmatpush1.msra.mxu0 0.0
  %1352 = vmatprep.subr.mxu0 0.0
  %1353 = vmatpush1.msra.mxu0 0.0
  %1354 = vmatprep.subr.mxu0 0.0
  %1355 = vmatpush1.msra.mxu0 0.0
  %1356 = vmatprep.subr.mxu0 0.0
  %1357 = vmatpush1.msra.mxu0 0.0
  %1358 = vmatprep.subr.mxu0 0.0
  %1359 = vmatpush1.msra.mxu0 0.0
  %1360 = vmatprep.subr.mxu0 0.0
  %1361 = vmatpush1.msra.mxu0 0.0
  %1362 = vmatprep.subr.mxu0 0.0
  %1363 = vmatpush1.msra.mxu0 0.0
  %1364 = vmatprep.subr.mxu0 0.0
  %1365 = vmatpush1.msra.mxu0 0.0
  %1366 = vmatprep.subr.mxu0 0.0
  %1367 = vmatpush1.msra.mxu0 0.0
  %1368 = vmatprep.mubr.f32.mxu0 0.0
  %1369 = vmatmul.mubr.f32.gmra.mrb[0].mxu0 %v791
  %v1370 = vpop.f32.mrb[0].mxu0
  %v1371 = vadd.f32 %v777, %v1370
  %v1372 = vpop.f32.mrb[0].mxu0
  %1373 = vmatprep.mubr.f32.mxu0 0.0
  %1374 = vmatmul.mubr.f32.gmra.mrb[0].mxu0 %v794
  %v1375 = vpop.f32.mrb[0].mxu0
  %v1376 = vadd.f32 %v782, %v1375
  %v1377 = vpop.f32.mrb[0].mxu0
  %1378 = vmatprep.mubr.f32.mxu0 0.0
  %1379 = vmatmul.mubr.f32.gmra.mrb[0].mxu0 %v797
  %v1380 = vpop.f32.mrb[0].mxu0
  %v1381 = vadd.f32 %v787, %v1380
  %v1382 = vpop.f32.mrb[0].mxu0
  %1383 = vdwg.mxu0
  %v1384 = vadd.f32 %v589, %v1371
  %v1385 = vxor.u32 %v1384, 2147483648
  %v1386 = vmul.f32 %v1385, 1.442695
  %v1387 = vpow.pop %v1386
  %v1388 = vadd.f32 %v1387, 1.0
  %v1389 = vrcp.pop %v1388
  %v1390 = vmul.f32 1.0, %v1389
  %v1391 = vadd.f32 %v594, %v1376
  %v1392 = vxor.u32 %v1391, 2147483648
  %v1393 = vmul.f32 %v1392, 1.442695
  %v1394 = vpow.pop %v1393
  %v1395 = vadd.f32 %v1394, 1.0
  %v1396 = vrcp.pop %v1395
  %v1397 = vmul.f32 1.0, %v1396
  %v1398 = vmul.f32 %v1390, %v1381
  %v1399 = vadd.f32 %v599, %v1398
  %v1400 = vtanh.pop %v1399
  %v1401 = vsub.f32 1.0, %v1397
  %v1402 = vmul.f32 %v1401, %v1400
  %v1403 = vmul.f32 %v1397, %v1303
  %v1404 = vadd.f32 %v1402, %v1403
  %1405 = vmatprep.subr.mxu0 0.0
  %1406 = vmatpush1.msra.mxu0 %v1404
  %1407 = vmatprep.subr.mxu0 0.0
  %1408 = vmatpush1.msra.mxu0 0.0
  %1409 = vmatprep.subr.mxu0 0.0
  %1410 = vmatpush1.msra.mxu0 0.0
  %1411 = vmatprep.subr.mxu0 0.0
  %1412 = vmatpush1.msra.mxu0 0.0
  %1413 = vmatprep.subr.mxu0 0.0
  %1414 = vmatpush1.msra.mxu0 0.0
  %1415 = vmatprep.subr.mxu0 0.0
  %1416 = vmatpush1.msra.mxu0 0.0
  %1417 = vmatprep.subr.mxu0 0.0
  %1418 = vmatpush1.msra.mxu0 0.0
  %1419 = vmatprep.subr.mxu0 0.0
  %1420 = vmatpush1.msra.mxu0 0.0
  %1421 = vmatprep.subr.mxu0 0.0
  %1422 = vmatpush1.msra.mxu0 0.0
  %1423 = vmatprep.subr.mxu0 0.0
  %1424 = vmatpush1.msra.mxu0 0.0
  %1425 = vmatprep.subr.mxu0 0.0
  %1426 = vmatpush1.msra.mxu0 0.0
  %1427 = vmatprep.subr.mxu0 0.0
  %1428 = vmatpush1.msra.mxu0 0.0
  %1429 = vmatprep.subr.mxu0 0.0
  %1430 = vmatpush1.msra.mxu0 0.0
  %1431 = vmatprep.subr.mxu0 0.0
  %1432 = vmatpush1.msra.mxu0 0.0
  %1433 = vmatprep.subr.mxu0 0.0
  %1434 = vmatpush1.msra.mxu0 0.0
  %1435 = vmatprep.subr.mxu0 0.0
  %1436 = vmatpush1.msra.mxu0 0.0
  %1437 = vmatprep.subr.mxu0 0.0
  %1438 = vmatpush1.msra.mxu0 0.0
  %1439 = vmatprep.subr.mxu0 0.0
  %1440 = vmatpush1.msra.mxu0 0.0
  %1441 = vmatprep.subr.mxu0 0.0
  %1442 = vmatpush1.msra.mxu0 0.0
  %1443 = vmatprep.subr.mxu0 0.0
  %1444 = vmatpush1.msra.mxu0 0.0
  %1445 = vmatprep.subr.mxu0 0.0
  %1446 = vmatpush1.msra.mxu0 0.0
  %1447 = vmatprep.subr.mxu0 0.0
  %1448 = vmatpush1.msra.mxu0 0.0
  %1449 = vmatprep.subr.mxu0 0.0
  %1450 = vmatpush1.msra.mxu0 0.0
  %1451 = vmatprep.subr.mxu0 0.0
  %1452 = vmatpush1.msra.mxu0 0.0
  %1453 = vmatprep.subr.mxu0 0.0
  %1454 = vmatpush1.msra.mxu0 0.0
  %1455 = vmatprep.subr.mxu0 0.0
  %1456 = vmatpush1.msra.mxu0 0.0
  %1457 = vmatprep.subr.mxu0 0.0
  %1458 = vmatpush1.msra.mxu0 0.0
  %1459 = vmatprep.subr.mxu0 0.0
  %1460 = vmatpush1.msra.mxu0 0.0
  %1461 = vmatprep.subr.mxu0 0.0
  %1462 = vmatpush1.msra.mxu0 0.0
  %1463 = vmatprep.subr.mxu0 0.0
  %1464 = vmatpush1.msra.mxu0 0.0
  %1465 = vmatprep.subr.mxu0 0.0
  %1466 = vmatpush1.msra.mxu0 0.0
  %1467 = vmatprep.subr.mxu0 0.0
  %1468 = vmatpush1.msra.mxu0 0.0
  %1469 = vmatprep.mubr.f32.mxu0 0.0
  %1470 = vmatmul.mubr.f32.gmra.mrb[0].mxu0 %v791
  %v1471 = vpop.f32.mrb[0].mxu0
  %v1472 = vadd.f32 %v777, %v1471
  %v1473 = vpop.f32.mrb[0].mxu0
  %1474 = vmatprep.mubr.f32.mxu0 0.0
  %1475 = vmatmul.mubr.f32.gmra.mrb[0].mxu0 %v794
  %v1476 = vpop.f32.mrb[0].mxu0
  %v1477 = vadd.f32 %v782, %v1476
  %v1478 = vpop.f32.mrb[0].mxu0
  %1479 = vmatprep.mubr.f32.mxu0 0.0
  %1480 = vmatmul.mubr.f32.gmra.mrb[0].mxu0 %v797
  %v1481 = vpop.f32.mrb[0].mxu0
  %v1482 = vadd.f32 %v787, %v1481
  %v1483 = vpop.f32.mrb[0].mxu0
  %1484 = vdwg.mxu0
  %v1485 = vadd.f32 %v672, %v1472
  %v1486 = vxor.u32 %v1485, 2147483648
  %v1487 = vmul.f32 %v1486, 1.442695
  %v1488 = vpow.pop %v1487
  %v1489 = vadd.f32 %v1488, 1.0
  %v1490 = vrcp.pop %v1489
  %v1491 = vmul.f32 1.0, %v1490
  %v1492 = vadd.f32 %v677, %v1477
  %v1493 = vxor.u32 %v1492, 2147483648
  %v1494 = vmul.f32 %v1493, 1.442695
  %v1495 = vpow.pop %v1494
  %v1496 = vadd.f32 %v1495, 1.0
  %v1497 = vrcp.pop %v1496
  %v1498 = vmul.f32 1.0, %v1497
  %v1499 = vmul.f32 %v1491, %v1482
  %v1500 = vadd.f32 %v682, %v1499
  %v1501 = vtanh.pop %v1500
  %v1502 = vsub.f32 1.0, %v1498
  %v1503 = vmul.f32 %v1502, %v1501
  %v1504 = vmul.f32 %v1498, %v1404
  %v1505 = vadd.f32 %v1503, %v1504
  %1506 = vmatprep.subr.mxu0 0.0
  %1507 = vmatpush1.msra.mxu0 %v1505
  %1508 = vmatprep.subr.mxu0 0.0
  %1509 = vmatpush1.msra.mxu0 0.0
  %1510 = vmatprep.subr.mxu0 0.0
  %1511 = vmatpush1.msra.mxu0 0.0
  %1512 = vmatprep.subr.mxu0 0.0
  %1513 = vmatpush1.msra.mxu0 0.0
  %1514 = vmatprep.subr.mxu0 0.0
  %1515 = vmatpush1.msra.mxu0 0.0
  %1516 = vmatprep.subr.mxu0 0.0
  %1517 = vmatpush1.msra.mxu0 0.0
  %1518 = vmatprep.subr.mxu0 0.0
  %1519 = vmatpush1.msra.mxu0 0.0
  %1520 = vmatprep.subr.mxu0 0.0
  %1521 = vmatpush1.msra.mxu0 0.0
  %1522 = vmatprep.subr.mxu0 0.0
  %1523 = vmatpush1.msra.mxu0 0.0
  %1524 = vmatprep.subr.mxu0 0.0
  %1525 = vmatpush1.msra.mxu0 0.0
  %1526 = vmatprep.subr.mxu0 0.0
  %1527 = vmatpush1.msra.mxu0 0.0
  %1528 = vmatprep.subr.mxu0 0.0
  %1529 = vmatpush1.msra.mxu0 0.0
  %1530 = vmatprep.subr.mxu0 0.0
  %1531 = vmatpush1.msra.mxu0 0.0
  %1532 = vmatprep.subr.mxu0 0.0
  %1533 = vmatpush1.msra.mxu0 0.0
  %1534 = vmatprep.subr.mxu0 0.0
  %1535 = vmatpush1.msra.mxu0 0.0
  %1536 = vmatprep.subr.mxu0 0.0
  %1537 = vmatpush1.msra.mxu0 0.0
  %1538 = vmatprep.subr.mxu0 0.0
  %1539 = vmatpush1.msra.mxu0 0.0
  %1540 = vmatprep.subr.mxu0 0.0
  %1541 = vmatpush1.msra.mxu0 0.0
  %1542 = vmatprep.subr.mxu0 0.0
  %1543 = vmatpush1.msra.mxu0 0.0
  %1544 = vmatprep.subr.mxu0 0.0
  %1545 = vmatpush1.msra.mxu0 0.0
  %1546 = vmatprep.subr.mxu0 0.0
  %1547 = vmatpush1.msra.mxu0 0.0
  %1548 = vmatprep.subr.mxu0 0.0
  %1549 = vmatpush1.msra.mxu0 0.0
  %1550 = vmatprep.subr.mxu0 0.0
  %1551 = vmatpush1.msra.mxu0 0.0
  %1552 = vmatprep.subr.mxu0 0.0
  %1553 = vmatpush1.msra.mxu0 0.0
  %1554 = vmatprep.subr.mxu0 0.0
  %1555 = vmatpush1.msra.mxu0 0.0
  %1556 = vmatprep.subr.mxu0 0.0
  %1557 = vmatpush1.msra.mxu0 0.0
  %1558 = vmatprep.subr.mxu0 0.0
  %1559 = vmatpush1.msra.mxu0 0.0
  %1560 = vmatprep.subr.mxu0 0.0
  %1561 = vmatpush1.msra.mxu0 0.0
  %1562 = vmatprep.subr.mxu0 0.0
  %1563 = vmatpush1.msra.mxu0 0.0
  %1564 = vmatprep.subr.mxu0 0.0
  %1565 = vmatpush1.msra.mxu0 0.0
  %1566 = vmatprep.subr.mxu0 0.0
  %1567 = vmatpush1.msra.mxu0 0.0
  %1568 = vmatprep.subr.mxu0 0.0
  %1569 = vmatpush1.msra.mxu0 0.0
  %1570 = vmatprep.mubr.f32.mxu0 0.0
  %1571 = vmatmul.mubr.f32.gmra.mrb[0].mxu0 %v791
  %v1572 = vpop.f32.mrb[0].mxu0
  %v1573 = vadd.f32 %v777, %v1572
  %v1574 = vpop.f32.mrb[0].mxu0
  %1575 = vmatprep.mubr.f32.mxu0 0.0
  %1576 = vmatmul.mubr.f32.gmra.mrb[0].mxu0 %v794
  %v1577 = vpop.f32.mrb[0].mxu0
  %v1578 = vadd.f32 %v782, %v1577
  %v1579 = vpop.f32.mrb[0].mxu0
  %1580 = vmatprep.mubr.f32.mxu0 0.0
  %1581 = vmatmul.mubr.f32.gmra.mrb[0].mxu0 %v797
  %v1582 = vpop.f32.mrb[0].mxu0
  %v1583 = vadd.f32 %v787, %v1582
  %v1584 = vpop.f32.mrb[0].mxu0
  %1585 = vdwg.mxu0
  %v1586 = vadd.f32 %v755, %v1573
  %v1587 = vxor.u32 %v1586, 2147483648
  %v1588 = vmul.f32 %v1587, 1.442695
  %v1589 = vpow.pop %v1588
  %v1590 = vadd.f32 %v1589, 1.0
  %v1591 = vrcp.pop %v1590
  %v1592 = vmul.f32 1.0, %v1591
  %v1593 = vadd.f32 %v760, %v1578
  %v1594 = vxor.u32 %v1593, 2147483648
  %v1595 = vmul.f32 %v1594, 1.442695
  %v1596 = vpow.pop %v1595
  %v1597 = vadd.f32 %v1596, 1.0
  %v1598 = vrcp.pop %v1597
  %v1599 = vmul.f32 1.0, %v1598
  %v1600 = vmul.f32 %v1592, %v1583
  %v1601 = vadd.f32 %v765, %v1600
  %v1602 = vtanh.pop %v1601
  %v1603 = vsub.f32 1.0, %v1599
  %v1604 = vmul.f32 %v1603, %v1602
  %v1605 = vmul.f32 %v1599, %v1505
  %v1606 = vadd.f32 %v1604, %v1605
  %v1607 = vld [vmem:[%s5] sm:$0xff]
  %v1608 = vld [vmem:[%s5 + $0x8] sm:$0x3]
  %v1609 = vld [vmem:[%s6] sm:$0xff]
  %v1610 = vld [vmem:[%s6 + $0x8] sm:$0x3]
  %1612 = vset.pattern.permute.xlu0 0
  %1613 = vperm.xlu0 %1612, %v1609
  %v1614 = vpop.permute.xlu0 %1613
  %1617 = vset.pattern.permute.xlu0 0
  %1618 = vperm.xlu0 %1617, %v1610
  %v1619 = vpop.permute.xlu0 %1618
  %vm1621 = vcmask 523264
  %v1623 = vsel %vm1621, %v1607, 0
  %v1626 = vsel %vm1621, %v1608, 0
  %1628 = vmatprep.subr.mxu0 0.0
  %1629 = vmatpush1.msra.mxu0 %v899
  %1630 = vmatprep.subr.mxu0 0.0
  %1631 = vmatpush1.msra.mxu0 %v1000
  %1632 = vmatprep.subr.mxu0 0.0
  %1633 = vmatpush1.msra.mxu0 %v1101
  %1634 = vmatprep.subr.mxu0 0.0
  %1635 = vmatpush1.msra.mxu0 %v1202
  %1636 = vmatprep.subr.mxu0 0.0
  %1637 = vmatpush1.msra.mxu0 %v1303
  %1638 = vmatprep.subr.mxu0 0.0
  %1639 = vmatpush1.msra.mxu0 %v1404
  %1640 = vmatprep.subr.mxu0 0.0
  %1641 = vmatpush1.msra.mxu0 %v1505
  %1642 = vmatprep.subr.mxu0 0.0
  %1643 = vmatpush1.msra.mxu0 %v1606
  %1644 = vmatprep.subr.mxu0 0.0
  %1645 = vmatpush1.msra.mxu0 0.0
  %1646 = vmatprep.subr.mxu0 0.0
  %1647 = vmatpush1.msra.mxu0 0.0
  %1648 = vmatprep.subr.mxu0 0.0
  %1649 = vmatpush1.msra.mxu0 0.0
  %1650 = vmatprep.subr.mxu0 0.0
  %1651 = vmatpush1.msra.mxu0 0.0
  %1652 = vmatprep.subr.mxu0 0.0
  %1653 = vmatpush1.msra.mxu0 0.0
  %1654 = vmatprep.subr.mxu0 0.0
  %1655 = vmatpush1.msra.mxu0 0.0
  %1656 = vmatprep.subr.mxu0 0.0
  %1657 = vmatpush1.msra.mxu0 0.0
  %1658 = vmatprep.subr.mxu0 0.0
  %1659 = vmatpush1.msra.mxu0 0.0
  %1660 = vmatprep.subr.mxu0 0.0
  %1661 = vmatpush1.msra.mxu0 0.0
  %1662 = vmatprep.subr.mxu0 0.0
  %1663 = vmatpush1.msra.mxu0 0.0
  %1664 = vmatprep.subr.mxu0 0.0
  %1665 = vmatpush1.msra.mxu0 0.0
  %1666 = vmatprep.subr.mxu0 0.0
  %1667 = vmatpush1.msra.mxu0 0.0
  %1668 = vmatprep.subr.mxu0 0.0
  %1669 = vmatpush1.msra.mxu0 0.0
  %1670 = vmatprep.subr.mxu0 0.0
  %1671 = vmatpush1.msra.mxu0 0.0
  %1672 = vmatprep.subr.mxu0 0.0
  %1673 = vmatpush1.msra.mxu0 0.0
  %1674 = vmatprep.subr.mxu0 0.0
  %1675 = vmatpush1.msra.mxu0 0.0
  %1676 = vmatprep.subr.mxu0 0.0
  %1677 = vmatpush1.msra.mxu0 0.0
  %1678 = vmatprep.subr.mxu0 0.0
  %1679 = vmatpush1.msra.mxu0 0.0
  %1680 = vmatprep.subr.mxu0 0.0
  %1681 = vmatpush1.msra.mxu0 0.0
  %1682 = vmatprep.subr.mxu0 0.0
  %1683 = vmatpush1.msra.mxu0 0.0
  %1684 = vmatprep.subr.mxu0 0.0
  %1685 = vmatpush1.msra.mxu0 0.0
  %1686 = vmatprep.subr.mxu0 0.0
  %1687 = vmatpush1.msra.mxu0 0.0
  %1688 = vmatprep.subr.mxu0 0.0
  %1689 = vmatpush1.msra.mxu0 0.0
  %1690 = vmatprep.subr.mxu0 0.0
  %1691 = vmatpush1.msra.mxu0 0.0
  %1692 = vmatprep.mubr.f32.mxu0 0.0
  %1693 = vmatmul.mubr.f32.gmra.mrb[0].mxu0 %v1623
  %v1694 = vpop.f32.mrb[0].mxu0
  %v1695 = vadd.f32 %v1614, %v1694
  %v1696 = vpop.f32.mrb[0].mxu0
  %1697 = vmatprep.mubr.f32.mxu0 0.0
  %1698 = vmatmul.mubr.f32.gmra.mrb[0].mxu0 %v1626
  %v1699 = vpop.f32.mrb[0].mxu0
  %v1700 = vadd.f32 %v1619, %v1699
  %v1701 = vpop.f32.mrb[0].mxu0
  %1702 = vdwg.mxu0
  %v1703 = vld [vmem:[%s7] sm:$0x3f]
  %v1704 = vld [vmem:[%s8] sm:$0x3f]
  %1706 = vset.pattern.permute.xlu0 0
  %1707 = vperm.xlu0 %1706, %v1704
  %v1708 = vpop.permute.xlu0 %1707
  %vm1710 = vcmask 80896
  %v1712 = vsel %vm1710, %v1703, 0
  %vm1714 = vcmask 1041408
  %v1716 = vsel %vm1714, %v1700, 0
  %1718 = vmatprep.subr.mxu0 0.0
  %1719 = vmatpush1.msra.mxu0 %v1695
  %1720 = vmatprep.subr.mxu0 0.0
  %1721 = vmatpush1.msra.mxu0 %v1716
  %1722 = vmatprep.subr.mxu0 0.0
  %1723 = vmatpush1.msra.mxu0 0.0
  %1724 = vmatprep.subr.mxu0 0.0
  %1725 = vmatpush1.msra.mxu0 0.0
  %1726 = vmatprep.subr.mxu0 0.0
  %1727 = vmatpush1.msra.mxu0 0.0
  %1728 = vmatprep.subr.mxu0 0.0
  %1729 = vmatpush1.msra.mxu0 0.0
  %1730 = vmatprep.subr.mxu0 0.0
  %1731 = vmatpush1.msra.mxu0 0.0
  %1732 = vmatprep.subr.mxu0 0.0
  %1733 = vmatpush1.msra.mxu0 0.0
  %1734 = vmatprep.subr.mxu0 0.0
  %1735 = vmatpush1.msra.mxu0 0.0
  %1736 = vmatprep.subr.mxu0 0.0
  %1737 = vmatpush1.msra.mxu0 0.0
  %1738 = vmatprep.subr.mxu0 0.0
  %1739 = vmatpush1.msra.mxu0 0.0
  %1740 = vmatprep.subr.mxu0 0.0
  %1741 = vmatpush1.msra.mxu0 0.0
  %1742 = vmatprep.subr.mxu0 0.0
  %1743 = vmatpush1.msra.mxu0 0.0
  %1744 = vmatprep.subr.mxu0 0.0
  %1745 = vmatpush1.msra.mxu0 0.0
  %1746 = vmatprep.subr.mxu0 0.0
  %1747 = vmatpush1.msra.mxu0 0.0
  %1748 = vmatprep.subr.mxu0 0.0
  %1749 = vmatpush1.msra.mxu0 0.0
  %1750 = vmatprep.subr.mxu0 0.0
  %1751 = vmatpush1.msra.mxu0 0.0
  %1752 = vmatprep.subr.mxu0 0.0
  %1753 = vmatpush1.msra.mxu0 0.0
  %1754 = vmatprep.subr.mxu0 0.0
  %1755 = vmatpush1.msra.mxu0 0.0
  %1756 = vmatprep.subr.mxu0 0.0
  %1757 = vmatpush1.msra.mxu0 0.0
  %1758 = vmatprep.subr.mxu0 0.0
  %1759 = vmatpush1.msra.mxu0 0.0
  %1760 = vmatprep.subr.mxu0 0.0
  %1761 = vmatpush1.msra.mxu0 0.0
  %1762 = vmatprep.subr.mxu0 0.0
  %1763 = vmatpush1.msra.mxu0 0.0
  %1764 = vmatprep.subr.mxu0 0.0
  %1765 = vmatpush1.msra.mxu0 0.0
  %1766 = vmatprep.subr.mxu0 0.0
  %1767 = vmatpush1.msra.mxu0 0.0
  %1768 = vmatprep.subr.mxu0 0.0
  %1769 = vmatpush1.msra.mxu0 0.0
  %1770 = vmatprep.subr.mxu0 0.0
  %1771 = vmatpush1.msra.mxu0 0.0
  %1772 = vmatprep.subr.mxu0 0.0
  %1773 = vmatpush1.msra.mxu0 0.0
  %1774 = vmatprep.subr.mxu0 0.0
  %1775 = vmatpush1.msra.mxu0 0.0
  %1776 = vmatprep.subr.mxu0 0.0
  %1777 = vmatpush1.msra.mxu0 0.0
  %1778 = vmatprep.subr.mxu0 0.0
  %1779 = vmatpush1.msra.mxu0 0.0
  %1780 = vmatprep.subr.mxu0 0.0
  %1781 = vmatpush1.msra.mxu0 0.0
  %1782 = vmatprep.mubr.f32.mxu0 0.0
  %1783 = vmatmul.mubr.f32.gmra.mrb[0].mxu0 %v1712
  %v1784 = vpop.f32.mrb[0].mxu0
  %v1785 = vadd.f32 %v1708, %v1784
  %v1786 = vpop.f32.mrb[0].mxu0
  %1787 = vdwg.mxu0
  %vm1788 = vcmask 13312
  %1789 = vst.msk [vmem:[%s9] sm:$0x3f] %vm1788, %v1785
  // Predicated region
  $region38: #{sensor_model_forward.1} parent=0 // pred_check
    _
  $region39: #{sensor_model_forward.1} parent=0 // pred_check_branch
    %1791 = sbr.rel (0) target = $region41
  $region40: #{sensor_model_forward.1} parent=0 // pred_region
    _
  $region41: #{sensor_model_forward.1} parent=0 // pred_fallthru
    _
  // Predicated region
  $region42: #{sensor_model_forward.1} parent=0 // pred_check
    _
  $region43: #{sensor_model_forward.1} parent=0 // pred_check_branch
    %1793 = sbr.rel (0) target = $region45
  $region44: #{sensor_model_forward.1} parent=0 // pred_region
    _
  $region45: #{sensor_model_forward.1} parent=0 // pred_fallthru
    _

</llo_original>
